<compile_context>
chip_gen: v7x
topology: tpu7x:2x2x1
jax: 0.10.0
libtpu: 0.0.40
codegen_flags: <defaults>
</compile_context>

<pallas_src>
import jax
import jax.numpy as jnp
from jax import lax
from jax.experimental import pallas as pl
from jax.experimental.pallas import tpu as pltpu


def _round_up(x, m):
    return ((x + m - 1) // m) * m


# ------------------------- in-kernel value helpers ---------------------------

def _shift_left_zero(v, off):
    """s[:, i] = v[:, i + off], zero fill at the vacated lanes.  `off` may be negative.

    Only interior (non-pad) pixel lanes are consumed downstream; for those the shift never
    crosses the per-image padded boundary, so zero fill / cross-image spill is harmless.
    """
    c, l = v.shape
    if off == 0:
        return v
    z = jnp.zeros((c, abs(off)), v.dtype)
    if off > 0:
        return jnp.concatenate([v[:, off:], z], axis=1)
    return jnp.concatenate([z, v[:, : l + off]], axis=1)


def _im2col_3x3(v, wpad):
    """(C, L) -> (9*C, L): stack the 9 tap-shifted copies along the contraction axis.

    Tap order (dy outer, dx inner) matches the (ky, kx, cin) ordering of the matmul weights.
    Call with bf16 input so the 9x replication moves bf16, not f32.
    """
    taps = []
    for dy in (-1, 0, 1):
        for dx in (-1, 0, 1):
            taps.append(_shift_left_zero(v, dy * wpad + dx))
    return jnp.concatenate(taps, axis=0)


# ------------------------------- fused kernel --------------------------------

def _make_fused_kernel(w):
    wpad = w + 2

    def kernel(x_ref, w1_ref, b1_ref, w2_ref, b2_ref, mask_ref, sel_ref, o_ref):
        # x_ref   : (Cinp, Nb*Lal)       bf16  padded inputs, image-major on the lane axis
        # w1_ref  : (C1, 9*Cinp)         bf16  conv1 weights, BN scale folded in
        # b1_ref  : (C1, 1)              f32   conv1 bias + BN shift
        # w2_ref  : (C2, 9*C1)           bf16
        # b2_ref  : (C2, 1)              f32
        # mask_ref: (1, Nb*Lal)          f32   1.0 at interior pixels, 0.0 at pad/alignment lanes
        # sel_ref : (Nb*Lal, Nb*npool)   bf16  block-diagonal one-hot pool-pixel selection
        # o_ref   : (C2, Nb*npool)       f32   lane-dense pooled output

        # ---- conv1 (3x3, pad 1): one MXU matmul + folded-BN bias + ReLU (f32 epilogue) ----
        p1 = _im2col_3x3(x_ref[...], wpad)                           # bf16 (9*Cinp, Nb*Lal)
        y1 = jnp.dot(w1_ref[...], p1, preferred_element_type=jnp.float32)
        y1 = jnp.maximum(y1 + b1_ref[...], 0.0) * mask_ref[...]      # re-zero pad border

        # ---- conv2 (3x3, pad 1): cast y1 ONCE, then one MXU matmul + bias + ReLU ----
        p2 = _im2col_3x3(y1.astype(jnp.bfloat16), wpad)              # bf16 (9*C1, Nb*Lal)
        y2 = jnp.dot(w2_ref[...], p2, preferred_element_type=jnp.float32)
        y2 = jnp.maximum(y2 + b2_ref[...], 0.0)

        # ---- fused 2x2/2 max-pool: window max via lane shifts (f32), compact via bf16 matmul
        m = jnp.maximum(jnp.maximum(y2, _shift_left_zero(y2, 1)),
                        jnp.maximum(_shift_left_zero(y2, wpad),
                                    _shift_left_zero(y2, wpad + 1)))
        pooled = jnp.dot(m.astype(jnp.bfloat16), sel_ref[...],
                         preferred_element_type=jnp.float32)         # exact one-hot pick
        o_ref[...] = pooled.astype(o_ref.dtype)

    return kernel


# -------------------------------- JAX wrapper ---------------------------------

@jax.jit
def cnn_module_forward(x_nchw, params):
    """Pallas implementation of CNN_Module.forward.  Input NCHW, output NCHW (N, C2, H/2, W/2)."""
    n, cin, h, w = x_nchw.shape
    c1 = params["w1m"].shape[0]
    c2 = params["w2m"].shape[0]
    assert h % 2 == 0 and w % 2 == 0
    hp, wp = h // 2, w // 2
    npool = hp * wp
    wpad = w + 2
    lpad = (h + 2) * (w + 2)
    lal = _round_up(lpad, 128)          # per-image lane stride, vreg-aligned
    cin_pad = _round_up(cin, 8)

    # batch tile: smallest Nb dividing N whose pooled output is lane-dense (multiple of 128)
    nb = n
    for cand in range(1, n + 1):
        if n % cand == 0 and (cand * npool) % 128 == 0:
            nb = cand
            break
    steps = n // nb

    # glue: channel pad to 8, spatial zero-pad, lane-align each image, image-major flatten, bf16
    xp = jnp.pad(x_nchw, ((0, 0), (0, cin_pad - cin), (1, 1), (1, 1)))
    xp = xp.reshape(n, cin_pad, lpad)
    xp = jnp.pad(xp, ((0, 0), (0, 0), (0, lal - lpad)))
    xflat = jnp.transpose(xp, (1, 0, 2)).reshape(cin_pad, n * lal).astype(jnp.bfloat16)

    # interior mask (1 at real pixels, 0 on pad border / alignment tail), tiled per batch tile
    row = jnp.arange(h + 2)
    col = jnp.arange(w + 2)
    interior = ((row >= 1) & (row <= h))[:, None] & ((col >= 1) & (col <= w))[None, :]
    mask_img = jnp.pad(interior.reshape(1, lpad).astype(jnp.float32), ((0, 0), (0, lal - lpad)))
    mask = jnp.tile(mask_img, (1, nb))

    # pool selection: column (yo*Wp + xo) of image b picks lane b*Lal + (2*yo+1)*wpad + (2*xo+1)
    yo = jnp.arange(hp)
    xo = jnp.arange(wp)
    tgt = ((2 * yo[:, None] + 1) * wpad + (2 * xo[None, :] + 1)).reshape(-1)       # (npool,)
    sel_img = (jnp.arange(lal)[:, None] == tgt[None, :]).astype(jnp.bfloat16)      # (Lal, npool)
    sel = jnp.kron(jnp.eye(nb, dtype=jnp.bfloat16), sel_img)                       # block-diag

    out = pl.pallas_call(
        _make_fused_kernel(w),
        out_shape=jax.ShapeDtypeStruct((c2, n * npool), jnp.float32),
        grid_spec=pltpu.PrefetchScalarGridSpec(
            num_scalar_prefetch=0,
            grid=(steps,),
            in_specs=[
                pl.BlockSpec((cin_pad, nb * lal), lambda i: (0, i)),
                pl.BlockSpec((c1, 9 * cin_pad), lambda i: (0, 0)),
                pl.BlockSpec((c1, 1), lambda i: (0, 0)),
                pl.BlockSpec((c2, 9 * c1), lambda i: (0, 0)),
                pl.BlockSpec((c2, 1), lambda i: (0, 0)),
                pl.BlockSpec((1, nb * lal), lambda i: (0, 0)),
                pl.BlockSpec((nb * lal, nb * npool), lambda i: (0, 0)),
            ],
            out_specs=pl.BlockSpec((c2, nb * npool), lambda i: (0, i)),
        ),
        compiler_params=pltpu.CompilerParams(dimension_semantics=("parallel",)),
    )(xflat, params["w1m"], params["b1v"], params["w2m"], params["b2v"], mask, sel)

    # lane-dense (C2, N*npool) -> NCHW (PyTorch layout); pure wrapper reshape/transpose
    return out.reshape(c2, n, npool).transpose(1, 0, 2).reshape(n, c2, hp, wp)


# --------------------------- parameter construction ---------------------------

def make_params(key, cin, c1, c2, eps=1e-5):
    ks = jax.random.split(key, 12)

    def layer(kw, kb, kg, kbeta, km, kv, ci, co):
        ci_pad = _round_up(ci, 8)
        w_hwio = 0.1 * jax.random.normal(kw, (3, 3, ci, co), jnp.float32)
        conv_b = 0.1 * jax.random.normal(kb, (co,), jnp.float32)
        gamma = 1.0 + 0.1 * jax.random.normal(kg, (co,), jnp.float32)
        beta = 0.1 * jax.random.normal(kbeta, (co,), jnp.float32)
        mean = 0.1 * jax.random.normal(km, (co,), jnp.float32)
        var = jax.random.uniform(kv, (co,), jnp.float32, 0.5, 1.5)
        scale = gamma / jnp.sqrt(var + eps)                  # BN folded (inference form)
        bias = beta - mean * scale + conv_b * scale
        # matmul-form weights, K ordered (ky, kx, cin_pad); BN scale folded in; bf16 for MXU
        wm = jnp.transpose(w_hwio, (3, 0, 1, 2))                               # (co, 3, 3, ci)
        wm = jnp.pad(wm, ((0, 0), (0, 0), (0, 0), (0, ci_pad - ci)))
        wm = (wm.reshape(co, 9 * ci_pad) * scale[:, None]).astype(jnp.bfloat16)
        return dict(w=w_hwio, scale=scale, bias=bias,
                    wm=wm, bv=bias.reshape(co, 1).astype(jnp.float32))

    l1 = layer(ks[0], ks[1], ks[2], ks[3], ks[4], ks[5], cin, c1)
    l2 = layer(ks[6], ks[7], ks[8], ks[9], ks[10], ks[11], c1, c2)
    return dict(w1=l1["w"], scale1=l1["scale"], bias1=l1["bias"], w1m=l1["wm"], b1v=l1["bv"],
                w2=l2["w"], scale2=l2["scale"], bias2=l2["bias"], w2m=l2["wm"], b2v=l2["bv"])


# ------------------------------ pure-JAX reference ----------------------------

def reference_forward(x_nchw, p):
    x = jnp.transpose(x_nchw, (0, 2, 3, 1))
    dn = ("NHWC", "HWIO", "NHWC")
    y = lax.conv_general_dilated(x, p["w1"], (1, 1), "SAME", dimension_numbers=dn)
    y = jnp.maximum(y * p["scale1"] + p["bias1"], 0.0)
    y = lax.conv_general_dilated(y, p["w2"], (1, 1), "SAME", dimension_numbers=dn)
    y = jnp.maximum(y * p["scale2"] + p["bias2"], 0.0)
    y = lax.reduce_window(y, -jnp.inf, lax.max, (1, 2, 2, 1), (1, 2, 2, 1), "VALID")
    return jnp.transpose(y, (0, 3, 1, 2))   # NHWC -> NCHW to match the Pallas output


# ----------------------------------- main -------------------------------------

if __name__ == "__main__":
    # CNN_Module(input_channels=4, output_channels=16) -> intermediate_out = 8
    N, CIN, H, W = 2, 4, 16, 16
    C1, C2 = 2 * CIN, 16

    key = jax.random.PRNGKey(0)
    kx, kp = jax.random.split(key)
    x_nchw = jax.random.normal(kx, (N, CIN, H, W), jnp.float32)  # PyTorch-style NCHW input
    params = make_params(kp, CIN, C1, C2)

    out = jax.block_until_ready(cnn_module_forward(x_nchw, params))
    assert out.shape == (N, C2, H // 2, W // 2), out.shape

    ref = jax.block_until_ready(reference_forward(x_nchw, params))
    # bf16 MXU operands (f32 accumulation, f32 epilogue) -> compare with bf16-level tolerance;
    # a structural bug would show errors of the order of the activations (~0.3+).
    max_err = jnp.max(jnp.abs(out - ref))
    assert jnp.allclose(out, ref, atol=5e-2, rtol=5e-2), f"max abs err = {max_err}"

    print("KERNEL_OK")
</pallas_src>

<mosaic_0001>
module attributes {stable_mosaic.version = 11 : i64} {
  func.func @kernel(%arg0: i32, %arg1: memref<8x768xbf16, #tpu.memory_space<vmem>>, %arg2: memref<8x72xbf16, #tpu.memory_space<vmem>>, %arg3: memref<8x1xf32, #tpu.memory_space<vmem>>, %arg4: memref<16x72xbf16, #tpu.memory_space<vmem>>, %arg5: memref<16x1xf32, #tpu.memory_space<vmem>>, %arg6: memref<1x768xf32, #tpu.memory_space<vmem>>, %arg7: memref<768x128xbf16, #tpu.memory_space<vmem>>, %arg8: memref<16x128xf32, #tpu.memory_space<vmem>>) attributes {dimension_semantics = [#tpu.dimension_semantics<parallel>], iteration_bounds = array<i64: 1>, scalar_prefetch = 0 : i64, scratch_operands = 0 : i64, tpu.core_type = #tpu.core_type<tc>, window_params = [{transform_indices = @transform_0, window_bounds = array<i64: 8, 768>}, {pipeline_mode = #tpu.pipeline_mode<synchronous>, transform_indices = @transform_1, window_bounds = array<i64: 8, 72>}, {pipeline_mode = #tpu.pipeline_mode<synchronous>, transform_indices = @transform_2, window_bounds = array<i64: 8, 1>}, {pipeline_mode = #tpu.pipeline_mode<synchronous>, transform_indices = @transform_3, window_bounds = array<i64: 16, 72>}, {pipeline_mode = #tpu.pipeline_mode<synchronous>, transform_indices = @transform_4, window_bounds = array<i64: 16, 1>}, {pipeline_mode = #tpu.pipeline_mode<synchronous>, transform_indices = @transform_5, window_bounds = array<i64: 1, 768>}, {pipeline_mode = #tpu.pipeline_mode<synchronous>, transform_indices = @transform_6, window_bounds = array<i64: 768, 128>}, {transform_indices = @transform_7, window_bounds = array<i64: 16, 128>}]} {
    %c0 = arith.constant 0 : index
    %c0_0 = arith.constant 0 : index
    %0 = vector.load %arg1[%c0, %c0_0] : memref<8x768xbf16, #tpu.memory_space<vmem>>, vector<8x768xbf16>
    %cst = arith.constant 0.000000e+00 : bf16
    %1 = vector.broadcast %cst : bf16 to vector<8x19xbf16>
    %2 = vector.extract_strided_slice %0 {offsets = [0, 0], sizes = [8, 749], strides = [1, 1]} : vector<8x768xbf16> to vector<8x749xbf16>
    %3 = tpu.concatenate %1, %2 in 1 : vector<8x19xbf16>, vector<8x749xbf16> -> vector<8x768xbf16>
    %cst_1 = arith.constant 0.000000e+00 : bf16
    %4 = vector.broadcast %cst_1 : bf16 to vector<8x18xbf16>
    %5 = vector.extract_strided_slice %0 {offsets = [0, 0], sizes = [8, 750], strides = [1, 1]} : vector<8x768xbf16> to vector<8x750xbf16>
    %6 = tpu.concatenate %4, %5 in 1 : vector<8x18xbf16>, vector<8x750xbf16> -> vector<8x768xbf16>
    %cst_2 = arith.constant 0.000000e+00 : bf16
    %7 = vector.broadcast %cst_2 : bf16 to vector<8x17xbf16>
    %8 = vector.extract_strided_slice %0 {offsets = [0, 0], sizes = [8, 751], strides = [1, 1]} : vector<8x768xbf16> to vector<8x751xbf16>
    %9 = tpu.concatenate %7, %8 in 1 : vector<8x17xbf16>, vector<8x751xbf16> -> vector<8x768xbf16>
    %cst_3 = arith.constant 0.000000e+00 : bf16
    %10 = vector.broadcast %cst_3 : bf16 to vector<8x1xbf16>
    %11 = vector.extract_strided_slice %0 {offsets = [0, 0], sizes = [8, 767], strides = [1, 1]} : vector<8x768xbf16> to vector<8x767xbf16>
    %12 = tpu.concatenate %10, %11 in 1 : vector<8x1xbf16>, vector<8x767xbf16> -> vector<8x768xbf16>
    %cst_4 = arith.constant 0.000000e+00 : bf16
    %13 = vector.broadcast %cst_4 : bf16 to vector<8x1xbf16>
    %14 = vector.extract_strided_slice %0 {offsets = [0, 1], sizes = [8, 767], strides = [1, 1]} : vector<8x768xbf16> to vector<8x767xbf16>
    %15 = tpu.concatenate %14, %13 in 1 : vector<8x767xbf16>, vector<8x1xbf16> -> vector<8x768xbf16>
    %cst_5 = arith.constant 0.000000e+00 : bf16
    %16 = vector.broadcast %cst_5 : bf16 to vector<8x17xbf16>
    %17 = vector.extract_strided_slice %0 {offsets = [0, 17], sizes = [8, 751], strides = [1, 1]} : vector<8x768xbf16> to vector<8x751xbf16>
    %18 = tpu.concatenate %17, %16 in 1 : vector<8x751xbf16>, vector<8x17xbf16> -> vector<8x768xbf16>
    %cst_6 = arith.constant 0.000000e+00 : bf16
    %19 = vector.broadcast %cst_6 : bf16 to vector<8x18xbf16>
    %20 = vector.extract_strided_slice %0 {offsets = [0, 18], sizes = [8, 750], strides = [1, 1]} : vector<8x768xbf16> to vector<8x750xbf16>
    %21 = tpu.concatenate %20, %19 in 1 : vector<8x750xbf16>, vector<8x18xbf16> -> vector<8x768xbf16>
    %cst_7 = arith.constant 0.000000e+00 : bf16
    %22 = vector.broadcast %cst_7 : bf16 to vector<8x19xbf16>
    %23 = vector.extract_strided_slice %0 {offsets = [0, 19], sizes = [8, 749], strides = [1, 1]} : vector<8x768xbf16> to vector<8x749xbf16>
    %24 = tpu.concatenate %23, %22 in 1 : vector<8x749xbf16>, vector<8x19xbf16> -> vector<8x768xbf16>
    %25 = tpu.concatenate %3, %6, %9, %12, %0, %15, %18, %21, %24 in 0 : vector<8x768xbf16>, vector<8x768xbf16>, vector<8x768xbf16>, vector<8x768xbf16>, vector<8x768xbf16>, vector<8x768xbf16>, vector<8x768xbf16>, vector<8x768xbf16>, vector<8x768xbf16> -> vector<72x768xbf16>
    %c0_8 = arith.constant 0 : index
    %c0_9 = arith.constant 0 : index
    %26 = vector.load %arg2[%c0_8, %c0_9] : memref<8x72xbf16, #tpu.memory_space<vmem>>, vector<8x72xbf16>
    %cst_10 = arith.constant dense<0.000000e+00> : vector<8x768xf32>
    %27 = tpu.matmul %26, %25, %cst_10 {dimension_numbers = #tpu.dot_dimension_numbers<[1], [0], [0], [1], [0, 0, 1, 1], [], []>} : vector<8x72xbf16>, vector<72x768xbf16>, vector<8x768xf32> -> vector<8x768xf32>
    %c0_11 = arith.constant 0 : index
    %c0_12 = arith.constant 0 : index
    %28 = vector.load %arg3[%c0_11, %c0_12] : memref<8x1xf32, #tpu.memory_space<vmem>>, vector<8x1xf32>
    %29 = vector.broadcast %28 : vector<8x1xf32> to vector<8x768xf32>
    %30 = arith.addf %27, %29 : vector<8x768xf32>
    %cst_13 = arith.constant 0.000000e+00 : f32
    %31 = vector.broadcast %cst_13 : f32 to vector<8x768xf32>
    %32 = arith.maximumf %30, %31 : vector<8x768xf32>
    %c0_14 = arith.constant 0 : index
    %c0_15 = arith.constant 0 : index
    %33 = vector.load %arg6[%c0_14, %c0_15] : memref<1x768xf32, #tpu.memory_space<vmem>>, vector<1x768xf32>
    %34 = vector.broadcast %33 : vector<1x768xf32> to vector<8x768xf32>
    %35 = arith.mulf %32, %34 : vector<8x768xf32>
    %36 = arith.truncf %35 : vector<8x768xf32> to vector<8x768xbf16>
    %cst_16 = arith.constant 0.000000e+00 : bf16
    %37 = vector.broadcast %cst_16 : bf16 to vector<8x19xbf16>
    %38 = vector.extract_strided_slice %36 {offsets = [0, 0], sizes = [8, 749], strides = [1, 1]} : vector<8x768xbf16> to vector<8x749xbf16>
    %39 = tpu.concatenate %37, %38 in 1 : vector<8x19xbf16>, vector<8x749xbf16> -> vector<8x768xbf16>
    %cst_17 = arith.constant 0.000000e+00 : bf16
    %40 = vector.broadcast %cst_17 : bf16 to vector<8x18xbf16>
    %41 = vector.extract_strided_slice %36 {offsets = [0, 0], sizes = [8, 750], strides = [1, 1]} : vector<8x768xbf16> to vector<8x750xbf16>
    %42 = tpu.concatenate %40, %41 in 1 : vector<8x18xbf16>, vector<8x750xbf16> -> vector<8x768xbf16>
    %cst_18 = arith.constant 0.000000e+00 : bf16
    %43 = vector.broadcast %cst_18 : bf16 to vector<8x17xbf16>
    %44 = vector.extract_strided_slice %36 {offsets = [0, 0], sizes = [8, 751], strides = [1, 1]} : vector<8x768xbf16> to vector<8x751xbf16>
    %45 = tpu.concatenate %43, %44 in 1 : vector<8x17xbf16>, vector<8x751xbf16> -> vector<8x768xbf16>
    %cst_19 = arith.constant 0.000000e+00 : bf16
    %46 = vector.broadcast %cst_19 : bf16 to vector<8x1xbf16>
    %47 = vector.extract_strided_slice %36 {offsets = [0, 0], sizes = [8, 767], strides = [1, 1]} : vector<8x768xbf16> to vector<8x767xbf16>
    %48 = tpu.concatenate %46, %47 in 1 : vector<8x1xbf16>, vector<8x767xbf16> -> vector<8x768xbf16>
    %cst_20 = arith.constant 0.000000e+00 : bf16
    %49 = vector.broadcast %cst_20 : bf16 to vector<8x1xbf16>
    %50 = vector.extract_strided_slice %36 {offsets = [0, 1], sizes = [8, 767], strides = [1, 1]} : vector<8x768xbf16> to vector<8x767xbf16>
    %51 = tpu.concatenate %50, %49 in 1 : vector<8x767xbf16>, vector<8x1xbf16> -> vector<8x768xbf16>
    %cst_21 = arith.constant 0.000000e+00 : bf16
    %52 = vector.broadcast %cst_21 : bf16 to vector<8x17xbf16>
    %53 = vector.extract_strided_slice %36 {offsets = [0, 17], sizes = [8, 751], strides = [1, 1]} : vector<8x768xbf16> to vector<8x751xbf16>
    %54 = tpu.concatenate %53, %52 in 1 : vector<8x751xbf16>, vector<8x17xbf16> -> vector<8x768xbf16>
    %cst_22 = arith.constant 0.000000e+00 : bf16
    %55 = vector.broadcast %cst_22 : bf16 to vector<8x18xbf16>
    %56 = vector.extract_strided_slice %36 {offsets = [0, 18], sizes = [8, 750], strides = [1, 1]} : vector<8x768xbf16> to vector<8x750xbf16>
    %57 = tpu.concatenate %56, %55 in 1 : vector<8x750xbf16>, vector<8x18xbf16> -> vector<8x768xbf16>
    %cst_23 = arith.constant 0.000000e+00 : bf16
    %58 = vector.broadcast %cst_23 : bf16 to vector<8x19xbf16>
    %59 = vector.extract_strided_slice %36 {offsets = [0, 19], sizes = [8, 749], strides = [1, 1]} : vector<8x768xbf16> to vector<8x749xbf16>
    %60 = tpu.concatenate %59, %58 in 1 : vector<8x749xbf16>, vector<8x19xbf16> -> vector<8x768xbf16>
    %61 = tpu.concatenate %39, %42, %45, %48, %36, %51, %54, %57, %60 in 0 : vector<8x768xbf16>, vector<8x768xbf16>, vector<8x768xbf16>, vector<8x768xbf16>, vector<8x768xbf16>, vector<8x768xbf16>, vector<8x768xbf16>, vector<8x768xbf16>, vector<8x768xbf16> -> vector<72x768xbf16>
    %c0_24 = arith.constant 0 : index
    %c0_25 = arith.constant 0 : index
    %62 = vector.load %arg4[%c0_24, %c0_25] : memref<16x72xbf16, #tpu.memory_space<vmem>>, vector<16x72xbf16>
    %cst_26 = arith.constant dense<0.000000e+00> : vector<16x768xf32>
    %63 = tpu.matmul %62, %61, %cst_26 {dimension_numbers = #tpu.dot_dimension_numbers<[1], [0], [0], [1], [0, 0, 1, 1], [], []>} : vector<16x72xbf16>, vector<72x768xbf16>, vector<16x768xf32> -> vector<16x768xf32>
    %c0_27 = arith.constant 0 : index
    %c0_28 = arith.constant 0 : index
    %64 = vector.load %arg5[%c0_27, %c0_28] : memref<16x1xf32, #tpu.memory_space<vmem>>, vector<16x1xf32>
    %65 = vector.broadcast %64 : vector<16x1xf32> to vector<16x768xf32>
    %66 = arith.addf %63, %65 : vector<16x768xf32>
    %cst_29 = arith.constant 0.000000e+00 : f32
    %67 = vector.broadcast %cst_29 : f32 to vector<16x768xf32>
    %68 = arith.maximumf %66, %67 : vector<16x768xf32>
    %cst_30 = arith.constant 0.000000e+00 : f32
    %69 = vector.broadcast %cst_30 : f32 to vector<16x1xf32>
    %70 = vector.extract_strided_slice %68 {offsets = [0, 1], sizes = [16, 767], strides = [1, 1]} : vector<16x768xf32> to vector<16x767xf32>
    %71 = tpu.concatenate %70, %69 in 1 : vector<16x767xf32>, vector<16x1xf32> -> vector<16x768xf32>
    %72 = arith.maximumf %68, %71 : vector<16x768xf32>
    %cst_31 = arith.constant 0.000000e+00 : f32
    %73 = vector.broadcast %cst_31 : f32 to vector<16x18xf32>
    %74 = vector.extract_strided_slice %68 {offsets = [0, 18], sizes = [16, 750], strides = [1, 1]} : vector<16x768xf32> to vector<16x750xf32>
    %75 = tpu.concatenate %74, %73 in 1 : vector<16x750xf32>, vector<16x18xf32> -> vector<16x768xf32>
    %cst_32 = arith.constant 0.000000e+00 : f32
    %76 = vector.broadcast %cst_32 : f32 to vector<16x19xf32>
    %77 = vector.extract_strided_slice %68 {offsets = [0, 19], sizes = [16, 749], strides = [1, 1]} : vector<16x768xf32> to vector<16x749xf32>
    %78 = tpu.concatenate %77, %76 in 1 : vector<16x749xf32>, vector<16x19xf32> -> vector<16x768xf32>
    %79 = arith.maximumf %75, %78 : vector<16x768xf32>
    %80 = arith.maximumf %72, %79 : vector<16x768xf32>
    %81 = arith.truncf %80 : vector<16x768xf32> to vector<16x768xbf16>
    %c0_33 = arith.constant 0 : index
    %c0_34 = arith.constant 0 : index
    %82 = vector.load %arg7[%c0_33, %c0_34] : memref<768x128xbf16, #tpu.memory_space<vmem>>, vector<768x128xbf16>
    %cst_35 = arith.constant dense<0.000000e+00> : vector<16x128xf32>
    %83 = tpu.matmul %81, %82, %cst_35 {dimension_numbers = #tpu.dot_dimension_numbers<[1], [0], [0], [1], [0, 0, 1, 1], [], []>} : vector<16x768xbf16>, vector<768x128xbf16>, vector<16x128xf32> -> vector<16x128xf32>
    %c0_36 = arith.constant 0 : index
    %c0_37 = arith.constant 0 : index
    %84 = vector.load %arg8[%c0_36, %c0_37] : memref<16x128xf32, #tpu.memory_space<vmem>>, vector<16x128xf32>
    tpu.vector_store %arg8[%c0_36, %c0_37], %83 {strides = array<i32>} : memref<16x128xf32, #tpu.memory_space<vmem>>, vector<16x128xf32>,
    return
  }
  func.func @transform_0(%arg0: i32) -> (i32, i32) {
    %c0_i32 = arith.constant 0 : i32
    %c0_i32_0 = arith.constant 0 : i32
    return %c0_i32, %arg0 : i32, i32
  }
  func.func @transform_1(%arg0: i32) -> (i32, i32) {
    %c0_i32 = arith.constant 0 : i32
    %c0_i32_0 = arith.constant 0 : i32
    %c0_i32_1 = arith.constant 0 : i32
    return %c0_i32, %c0_i32_0 : i32, i32
  }
  func.func @transform_2(%arg0: i32) -> (i32, i32) {
    %c0_i32 = arith.constant 0 : i32
    %c0_i32_0 = arith.constant 0 : i32
    %c0_i32_1 = arith.constant 0 : i32
    return %c0_i32, %c0_i32_0 : i32, i32
  }
  func.func @transform_3(%arg0: i32) -> (i32, i32) {
    %c0_i32 = arith.constant 0 : i32
    %c0_i32_0 = arith.constant 0 : i32
    %c0_i32_1 = arith.constant 0 : i32
    return %c0_i32, %c0_i32_0 : i32, i32
  }
  func.func @transform_4(%arg0: i32) -> (i32, i32) {
    %c0_i32 = arith.constant 0 : i32
    %c0_i32_0 = arith.constant 0 : i32
    %c0_i32_1 = arith.constant 0 : i32
    return %c0_i32, %c0_i32_0 : i32, i32
  }
  func.func @transform_5(%arg0: i32) -> (i32, i32) {
    %c0_i32 = arith.constant 0 : i32
    %c0_i32_0 = arith.constant 0 : i32
    %c0_i32_1 = arith.constant 0 : i32
    return %c0_i32, %c0_i32_0 : i32, i32
  }
  func.func @transform_6(%arg0: i32) -> (i32, i32) {
    %c0_i32 = arith.constant 0 : i32
    %c0_i32_0 = arith.constant 0 : i32
    %c0_i32_1 = arith.constant 0 : i32
    return %c0_i32, %c0_i32_0 : i32, i32
  }
  func.func @transform_7(%arg0: i32) -> (i32, i32) {
    %c0_i32 = arith.constant 0 : i32
    %c0_i32_0 = arith.constant 0 : i32
    return %c0_i32, %arg0 : i32, i32
  }
}

</mosaic_0001>

<llo_original>
// kernel: cnn_module_forward.1
$region0: #{cnn_module_forward.1}
  #allocation0 [shape = 'u32[]', space=smem, size = 0x4, offset = 0x4, fixed_abs, tag = 'smem constant byte address 0x4 - core index']
  #allocation1 [shape = 'u32[144,128]{1,0:T(1,128)}', space=vmem, size = 0x12000, scoped, tag = 'internal scratch']
  %s0 = inlined_call_operand.vmem [shape: bf16[8,768], index: 0, kind: input, shape index: {}]
  %s1 = inlined_call_operand.vmem [shape: bf16[8,72], index: 1, kind: input, shape index: {}]
  %s2 = inlined_call_operand.vmem [shape: f32[8,1], index: 2, kind: input, shape index: {}]
  %s3 = inlined_call_operand.vmem [shape: bf16[16,72], index: 3, kind: input, shape index: {}]
  %s4 = inlined_call_operand.vmem [shape: f32[16,1], index: 4, kind: input, shape index: {}]
  %s5 = inlined_call_operand.vmem [shape: f32[1,768], index: 5, kind: input, shape index: {}]
  %s6 = inlined_call_operand.vmem [shape: bf16[768,128], index: 6, kind: input, shape index: {}]
  %s7 = inlined_call_operand.vmem [shape: f32[16,128], index: 7, kind: output, shape index: {}]
  %s8 = sld [smem:[#allocation0]]
  $region38: #{cnn_module_forward.1} parent=0
    _
  %s10 = ssub.s32 1, %s8
  %s11 = scalar_select 0, %s10, %s8
  // Predicated region
  $region2: #{cnn_module_forward.1} parent=0 // pred_check
    _
  $region3: #{cnn_module_forward.1} parent=0 // pred_check_branch
    %13 = sbr.rel (0) target = $region5
  $region4: #{cnn_module_forward.1} parent=0 // pred_region
    _
  $region5: #{cnn_module_forward.1} parent=0 // pred_fallthru
    _
  // Predicated region
  $region6: #{cnn_module_forward.1} parent=0 // pred_check
    _
  $region7: #{cnn_module_forward.1} parent=0 // pred_check_branch
    %15 = sbr.rel (0) target = $region9
  $region8: #{cnn_module_forward.1} parent=0 // pred_region
    _
  $region9: #{cnn_module_forward.1} parent=0 // pred_fallthru
    _
  // Predicated region
  $region10: #{cnn_module_forward.1} parent=0 // pred_check
    _
  $region11: #{cnn_module_forward.1} parent=0 // pred_check_branch
    %17 = sbr.rel (0) target = $region13
  $region12: #{cnn_module_forward.1} parent=0 // pred_region
    _
  $region13: #{cnn_module_forward.1} parent=0 // pred_fallthru
    _
  // Predicated region
  $region14: #{cnn_module_forward.1} parent=0 // pred_check
    _
  $region15: #{cnn_module_forward.1} parent=0 // pred_check_branch
    %19 = sbr.rel (0) target = $region17
  $region16: #{cnn_module_forward.1} parent=0 // pred_region
    _
  $region17: #{cnn_module_forward.1} parent=0 // pred_fallthru
    _
  // Predicated region
  $region18: #{cnn_module_forward.1} parent=0 // pred_check
    _
  $region19: #{cnn_module_forward.1} parent=0 // pred_check_branch
    %21 = sbr.rel (0) target = $region21
  $region20: #{cnn_module_forward.1} parent=0 // pred_region
    _
  $region21: #{cnn_module_forward.1} parent=0 // pred_fallthru
    _
  // Predicated region
  $region22: #{cnn_module_forward.1} parent=0 // pred_check
    _
  $region23: #{cnn_module_forward.1} parent=0 // pred_check_branch
    %23 = sbr.rel (0) target = $region25
  $region24: #{cnn_module_forward.1} parent=0 // pred_region
    _
  $region25: #{cnn_module_forward.1} parent=0 // pred_fallthru
    _
  // Predicated region
  $region26: #{cnn_module_forward.1} parent=0 // pred_check
    _
  $region27: #{cnn_module_forward.1} parent=0 // pred_check_branch
    %25 = sbr.rel (0) target = $region29
  $region28: #{cnn_module_forward.1} parent=0 // pred_region
    _
  $region29: #{cnn_module_forward.1} parent=0 // pred_fallthru
    _
  %v27 = vld [vmem:[%s0] sm:$0xff]
  %v28 = vld [vmem:[%s0 + $0x8] sm:$0xff]
  %v29 = vld [vmem:[%s0 + $0x10] sm:$0xff]
  %v33 = vunpack.c.l.b16 %v27
  %v34 = vunpack.c.h.b16 %v27
  %v35 = vunpack.c.l.b16 %v28
  %v36 = vunpack.c.h.b16 %v28
  %v37 = vunpack.c.l.b16 %v29
  %v38 = vunpack.c.h.b16 %v29
  %v39 = vpack.c.b16 %v33, %v33
  %v40 = vpack.c.b16 %v34, %v34
  %v41 = vpack.c.b16 %v35, %v35
  %v42 = vpack.c.b16 %v36, %v36
  %v43 = vpack.c.b16 %v37, %v37
  %v44 = vpack.c.b16 %v38, %v38
  %45 = vrot.lane.b32.xlu0 %v39, 19
  %v46 = vpop.permute.xlu0 %45
  %47 = vrot.lane.b32.xlu0 %v40, 19
  %v48 = vpop.permute.xlu0 %47
  %49 = vrot.lane.b32.xlu0 %v41, 19
  %v50 = vpop.permute.xlu0 %49
  %51 = vrot.lane.b32.xlu0 %v42, 19
  %v52 = vpop.permute.xlu0 %51
  %53 = vrot.lane.b32.xlu0 %v43, 19
  %v54 = vpop.permute.xlu0 %53
  %55 = vrot.lane.b32.xlu0 %v44, 19
  %v56 = vpop.permute.xlu0 %55
  %vm57 = vcmask 154624
  %v58 = vsel %vm57, %v46, %v48
  %v59 = vsel %vm57, %v48, %v50
  %v60 = vsel %vm57, %v50, %v52
  %v61 = vsel %vm57, %v52, %v54
  %v62 = vsel %vm57, %v54, %v56
  %vm63 = vcmask 154624
  %v66 = vsel %vm63, 0, %v46
  %67 = vrot.lane.b32.xlu0 %v39, 18
  %v68 = vpop.permute.xlu0 %67
  %69 = vrot.lane.b32.xlu0 %v40, 18
  %v70 = vpop.permute.xlu0 %69
  %71 = vrot.lane.b32.xlu0 %v41, 18
  %v72 = vpop.permute.xlu0 %71
  %73 = vrot.lane.b32.xlu0 %v42, 18
  %v74 = vpop.permute.xlu0 %73
  %75 = vrot.lane.b32.xlu0 %v43, 18
  %v76 = vpop.permute.xlu0 %75
  %77 = vrot.lane.b32.xlu0 %v44, 18
  %v78 = vpop.permute.xlu0 %77
  %vm79 = vcmask 146432
  %v80 = vsel %vm79, %v68, %v70
  %v81 = vsel %vm79, %v70, %v72
  %v82 = vsel %vm79, %v72, %v74
  %v83 = vsel %vm79, %v74, %v76
  %v84 = vsel %vm79, %v76, %v78
  %vm85 = vcmask 146432
  %v87 = vsel %vm85, 0, %v68
  %88 = vrot.lane.b32.xlu0 %v39, 17
  %v89 = vpop.permute.xlu0 %88
  %90 = vrot.lane.b32.xlu0 %v40, 17
  %v91 = vpop.permute.xlu0 %90
  %92 = vrot.lane.b32.xlu0 %v41, 17
  %v93 = vpop.permute.xlu0 %92
  %94 = vrot.lane.b32.xlu0 %v42, 17
  %v95 = vpop.permute.xlu0 %94
  %96 = vrot.lane.b32.xlu0 %v43, 17
  %v97 = vpop.permute.xlu0 %96
  %98 = vrot.lane.b32.xlu0 %v44, 17
  %v99 = vpop.permute.xlu0 %98
  %vm100 = vcmask 138240
  %v101 = vsel %vm100, %v89, %v91
  %v102 = vsel %vm100, %v91, %v93
  %v103 = vsel %vm100, %v93, %v95
  %v104 = vsel %vm100, %v95, %v97
  %v105 = vsel %vm100, %v97, %v99
  %vm106 = vcmask 138240
  %v108 = vsel %vm106, 0, %v89
  %109 = vrot.lane.b32.xlu0 %v39, 1
  %v110 = vpop.permute.xlu0 %109
  %111 = vrot.lane.b32.xlu0 %v40, 1
  %v112 = vpop.permute.xlu0 %111
  %113 = vrot.lane.b32.xlu0 %v41, 1
  %v114 = vpop.permute.xlu0 %113
  %115 = vrot.lane.b32.xlu0 %v42, 1
  %v116 = vpop.permute.xlu0 %115
  %117 = vrot.lane.b32.xlu0 %v43, 1
  %v118 = vpop.permute.xlu0 %117
  %119 = vrot.lane.b32.xlu0 %v44, 1
  %v120 = vpop.permute.xlu0 %119
  %vm121 = vcmask 7168
  %v122 = vsel %vm121, %v110, %v112
  %v123 = vsel %vm121, %v112, %v114
  %v124 = vsel %vm121, %v114, %v116
  %v125 = vsel %vm121, %v116, %v118
  %v126 = vsel %vm121, %v118, %v120
  %vm127 = vcmask 7168
  %v129 = vsel %vm127, 0, %v110
  %130 = vrot.lane.b32.xlu0 %v39, 127
  %v131 = vpop.permute.xlu0 %130
  %132 = vrot.lane.b32.xlu0 %v40, 127
  %v133 = vpop.permute.xlu0 %132
  %134 = vrot.lane.b32.xlu0 %v41, 127
  %v135 = vpop.permute.xlu0 %134
  %136 = vrot.lane.b32.xlu0 %v42, 127
  %v137 = vpop.permute.xlu0 %136
  %138 = vrot.lane.b32.xlu0 %v43, 127
  %v139 = vpop.permute.xlu0 %138
  %140 = vrot.lane.b32.xlu0 %v44, 127
  %v141 = vpop.permute.xlu0 %140
  %vm142 = vcmask 1039360
  %v143 = vsel %vm142, %v131, %v133
  %v144 = vsel %vm142, %v133, %v135
  %v145 = vsel %vm142, %v135, %v137
  %v146 = vsel %vm142, %v137, %v139
  %v147 = vsel %vm142, %v139, %v141
  %vm148 = vcmask 1039360
  %v150 = vsel %vm148, %v141, 0
  %151 = vrot.lane.b32.xlu0 %v39, 111
  %v152 = vpop.permute.xlu0 %151
  %153 = vrot.lane.b32.xlu0 %v40, 111
  %v154 = vpop.permute.xlu0 %153
  %155 = vrot.lane.b32.xlu0 %v41, 111
  %v156 = vpop.permute.xlu0 %155
  %157 = vrot.lane.b32.xlu0 %v42, 111
  %v158 = vpop.permute.xlu0 %157
  %159 = vrot.lane.b32.xlu0 %v43, 111
  %v160 = vpop.permute.xlu0 %159
  %161 = vrot.lane.b32.xlu0 %v44, 111
  %v162 = vpop.permute.xlu0 %161
  %vm163 = vcmask 908288
  %v164 = vsel %vm163, %v152, %v154
  %v165 = vsel %vm163, %v154, %v156
  %v166 = vsel %vm163, %v156, %v158
  %v167 = vsel %vm163, %v158, %v160
  %v168 = vsel %vm163, %v160, %v162
  %vm169 = vcmask 908288
  %v171 = vsel %vm169, %v162, 0
  %172 = vrot.lane.b32.xlu0 %v39, 110
  %v173 = vpop.permute.xlu0 %172
  %174 = vrot.lane.b32.xlu0 %v40, 110
  %v175 = vpop.permute.xlu0 %174
  %176 = vrot.lane.b32.xlu0 %v41, 110
  %v177 = vpop.permute.xlu0 %176
  %178 = vrot.lane.b32.xlu0 %v42, 110
  %v179 = vpop.permute.xlu0 %178
  %180 = vrot.lane.b32.xlu0 %v43, 110
  %v181 = vpop.permute.xlu0 %180
  %182 = vrot.lane.b32.xlu0 %v44, 110
  %v183 = vpop.permute.xlu0 %182
  %vm184 = vcmask 900096
  %v185 = vsel %vm184, %v173, %v175
  %v186 = vsel %vm184, %v175, %v177
  %v187 = vsel %vm184, %v177, %v179
  %v188 = vsel %vm184, %v179, %v181
  %v189 = vsel %vm184, %v181, %v183
  %vm190 = vcmask 900096
  %v192 = vsel %vm190, %v183, 0
  %193 = vrot.lane.b32.xlu0 %v39, 109
  %v194 = vpop.permute.xlu0 %193
  %195 = vrot.lane.b32.xlu0 %v40, 109
  %v196 = vpop.permute.xlu0 %195
  %197 = vrot.lane.b32.xlu0 %v41, 109
  %v198 = vpop.permute.xlu0 %197
  %199 = vrot.lane.b32.xlu0 %v42, 109
  %v200 = vpop.permute.xlu0 %199
  %201 = vrot.lane.b32.xlu0 %v43, 109
  %v202 = vpop.permute.xlu0 %201
  %203 = vrot.lane.b32.xlu0 %v44, 109
  %v204 = vpop.permute.xlu0 %203
  %vm205 = vcmask 891904
  %v206 = vsel %vm205, %v194, %v196
  %v207 = vsel %vm205, %v196, %v198
  %v208 = vsel %vm205, %v198, %v200
  %v209 = vsel %vm205, %v200, %v202
  %v210 = vsel %vm205, %v202, %v204
  %vm211 = vcmask 891904
  %v213 = vsel %vm211, %v204, 0
  %v215 = vrot.slane %v87, 4
  %v216 = vrot.slane %v80, 4
  %v217 = vrot.slane %v81, 4
  %v218 = vrot.slane %v82, 4
  %v219 = vrot.slane %v83, 4
  %v220 = vrot.slane %v84, 4
  %v222 = vrot.slane %v129, 4
  %v223 = vrot.slane %v122, 4
  %v224 = vrot.slane %v123, 4
  %v225 = vrot.slane %v124, 4
  %v226 = vrot.slane %v125, 4
  %v227 = vrot.slane %v126, 4
  %v229 = vrot.slane %v143, 4
  %v230 = vrot.slane %v144, 4
  %v231 = vrot.slane %v145, 4
  %v232 = vrot.slane %v146, 4
  %v233 = vrot.slane %v147, 4
  %v234 = vrot.slane %v150, 4
  %v236 = vrot.slane %v185, 4
  %v237 = vrot.slane %v186, 4
  %v238 = vrot.slane %v187, 4
  %v239 = vrot.slane %v188, 4
  %v240 = vrot.slane %v189, 4
  %v241 = vrot.slane %v192, 4
  %vm242 = vcmask 1043456
  %v244 = vsel %vm242, %v66, %v215
  %v248 = vsel %vm242, %v58, %v216
  %v252 = vsel %vm242, %v59, %v217
  %v256 = vsel %vm242, %v60, %v218
  %v260 = vsel %vm242, %v61, %v219
  %v264 = vsel %vm242, %v62, %v220
  %v267 = vsel %vm242, %v108, %v222
  %v271 = vsel %vm242, %v101, %v223
  %v275 = vsel %vm242, %v102, %v224
  %v279 = vsel %vm242, %v103, %v225
  %v283 = vsel %vm242, %v104, %v226
  %v287 = vsel %vm242, %v105, %v227
  %v291 = vsel %vm242, %v39, %v229
  %v295 = vsel %vm242, %v40, %v230
  %v299 = vsel %vm242, %v41, %v231
  %v303 = vsel %vm242, %v42, %v232
  %v307 = vsel %vm242, %v43, %v233
  %v311 = vsel %vm242, %v44, %v234
  %v315 = vsel %vm242, %v164, %v236
  %v319 = vsel %vm242, %v165, %v237
  %v323 = vsel %vm242, %v166, %v238
  %v327 = vsel %vm242, %v167, %v239
  %v331 = vsel %vm242, %v168, %v240
  %v334 = vsel %vm242, %v171, %v241
  %v336 = vld [vmem:[%s1] sm:$0xf]
  %v337 = vld [vmem:[%s2] sm:$0xff]
  %339 = vset.pattern.permute.xlu0 0
  %340 = vperm.xlu0 %339, %v337
  %v341 = vpop.permute.xlu0 %340
  %vm343 = vcmask 588800
  %v345 = vsel %vm343, %v336, 0
  %v348 = vsel %vm242, %v206, 0
  %v351 = vsel %vm242, %v207, 0
  %v354 = vsel %vm242, %v208, 0
  %v357 = vsel %vm242, %v209, 0
  %v360 = vsel %vm242, %v210, 0
  %v362 = vsel %vm242, %v213, 0
  %364 = vmatprep.subr.bf16.mxu0 %v248
  %365 = vmatpush1.bf16.msra.mxu0 %v244
  %366 = vmatprep.subr.bf16.mxu0 %v271
  %367 = vmatpush1.bf16.msra.mxu0 %v267
  %368 = vmatprep.subr.bf16.mxu0 %v295
  %369 = vmatpush1.bf16.msra.mxu0 %v291
  %370 = vmatprep.subr.bf16.mxu0 %v319
  %371 = vmatpush1.bf16.msra.mxu0 %v315
  %372 = vmatprep.subr.bf16.mxu0 %v351
  %373 = vmatpush1.bf16.msra.mxu0 %v348
  %374 = vmatprep.subr.bf16.mxu0 0
  %375 = vmatpush1.bf16.msra.mxu0 0
  %376 = vmatprep.subr.bf16.mxu0 0
  %377 = vmatpush1.bf16.msra.mxu0 0
  %378 = vmatprep.subr.bf16.mxu0 0
  %379 = vmatpush1.bf16.msra.mxu0 0
  %380 = vmatprep.subr.bf16.mxu0 0
  %381 = vmatpush1.bf16.msra.mxu0 0
  %382 = vmatprep.subr.bf16.mxu0 0
  %383 = vmatpush1.bf16.msra.mxu0 0
  %384 = vmatprep.subr.bf16.mxu0 0
  %385 = vmatpush1.bf16.msra.mxu0 0
  %386 = vmatprep.subr.bf16.mxu0 0
  %387 = vmatpush1.bf16.msra.mxu0 0
  %388 = vmatprep.subr.bf16.mxu0 0
  %389 = vmatpush1.bf16.msra.mxu0 0
  %390 = vmatprep.subr.bf16.mxu0 0
  %391 = vmatpush1.bf16.msra.mxu0 0
  %392 = vmatprep.subr.bf16.mxu0 0
  %393 = vmatpush1.bf16.msra.mxu0 0
  %394 = vmatprep.subr.bf16.mxu0 0
  %395 = vmatpush1.bf16.msra.mxu0 0
  %396 = vmatprep.mubr.bf16.mxu0 0
  %397 = vmatmul.mubr.bf16.gmra.mrb[0].mxu0 %v345
  %v398 = vpop.f32.mrb[0].mxu0
  %v399 = vadd.f32 %v341, %v398
  %v400 = vpop.f32.mrb[0].mxu0
  %v401 = vadd.f32 %v341, %v400
  %v402 = vpop.f32.mrb[0].mxu0
  %v403 = vpop.f32.mrb[0].mxu0
  %404 = vdwg.mxu0
  %405 = vmatprep.subr.bf16.mxu0 %v256
  %406 = vmatpush1.bf16.msra.mxu0 %v252
  %407 = vmatprep.subr.bf16.mxu0 %v279
  %408 = vmatpush1.bf16.msra.mxu0 %v275
  %409 = vmatprep.subr.bf16.mxu0 %v303
  %410 = vmatpush1.bf16.msra.mxu0 %v299
  %411 = vmatprep.subr.bf16.mxu0 %v327
  %412 = vmatpush1.bf16.msra.mxu0 %v323
  %413 = vmatprep.subr.bf16.mxu0 %v357
  %414 = vmatpush1.bf16.msra.mxu0 %v354
  %415 = vmatprep.subr.bf16.mxu0 0
  %416 = vmatpush1.bf16.msra.mxu0 0
  %417 = vmatprep.subr.bf16.mxu0 0
  %418 = vmatpush1.bf16.msra.mxu0 0
  %419 = vmatprep.subr.bf16.mxu0 0
  %420 = vmatpush1.bf16.msra.mxu0 0
  %421 = vmatprep.subr.bf16.mxu0 0
  %422 = vmatpush1.bf16.msra.mxu0 0
  %423 = vmatprep.subr.bf16.mxu0 0
  %424 = vmatpush1.bf16.msra.mxu0 0
  %425 = vmatprep.subr.bf16.mxu0 0
  %426 = vmatpush1.bf16.msra.mxu0 0
  %427 = vmatprep.subr.bf16.mxu0 0
  %428 = vmatpush1.bf16.msra.mxu0 0
  %429 = vmatprep.subr.bf16.mxu0 0
  %430 = vmatpush1.bf16.msra.mxu0 0
  %431 = vmatprep.subr.bf16.mxu0 0
  %432 = vmatpush1.bf16.msra.mxu0 0
  %433 = vmatprep.subr.bf16.mxu0 0
  %434 = vmatpush1.bf16.msra.mxu0 0
  %435 = vmatprep.subr.bf16.mxu0 0
  %436 = vmatpush1.bf16.msra.mxu0 0
  %437 = vmatprep.mubr.bf16.mxu0 0
  %438 = vmatmul.mubr.bf16.gmra.mrb[0].mxu0 %v345
  %v439 = vpop.f32.mrb[0].mxu0
  %v440 = vadd.f32 %v341, %v439
  %v441 = vpop.f32.mrb[0].mxu0
  %v442 = vadd.f32 %v341, %v441
  %v443 = vpop.f32.mrb[0].mxu0
  %v444 = vpop.f32.mrb[0].mxu0
  %445 = vdwg.mxu0
  %446 = vmatprep.subr.bf16.mxu0 %v264
  %447 = vmatpush1.bf16.msra.mxu0 %v260
  %448 = vmatprep.subr.bf16.mxu0 %v287
  %449 = vmatpush1.bf16.msra.mxu0 %v283
  %450 = vmatprep.subr.bf16.mxu0 %v311
  %451 = vmatpush1.bf16.msra.mxu0 %v307
  %452 = vmatprep.subr.bf16.mxu0 %v334
  %453 = vmatpush1.bf16.msra.mxu0 %v331
  %454 = vmatprep.subr.bf16.mxu0 %v362
  %455 = vmatpush1.bf16.msra.mxu0 %v360
  %456 = vmatprep.subr.bf16.mxu0 0
  %457 = vmatpush1.bf16.msra.mxu0 0
  %458 = vmatprep.subr.bf16.mxu0 0
  %459 = vmatpush1.bf16.msra.mxu0 0
  %460 = vmatprep.subr.bf16.mxu0 0
  %461 = vmatpush1.bf16.msra.mxu0 0
  %462 = vmatprep.subr.bf16.mxu0 0
  %463 = vmatpush1.bf16.msra.mxu0 0
  %464 = vmatprep.subr.bf16.mxu0 0
  %465 = vmatpush1.bf16.msra.mxu0 0
  %466 = vmatprep.subr.bf16.mxu0 0
  %467 = vmatpush1.bf16.msra.mxu0 0
  %468 = vmatprep.subr.bf16.mxu0 0
  %469 = vmatpush1.bf16.msra.mxu0 0
  %470 = vmatprep.subr.bf16.mxu0 0
  %471 = vmatpush1.bf16.msra.mxu0 0
  %472 = vmatprep.subr.bf16.mxu0 0
  %473 = vmatpush1.bf16.msra.mxu0 0
  %474 = vmatprep.subr.bf16.mxu0 0
  %475 = vmatpush1.bf16.msra.mxu0 0
  %476 = vmatprep.subr.bf16.mxu0 0
  %477 = vmatpush1.bf16.msra.mxu0 0
  %478 = vmatprep.mubr.bf16.mxu0 0
  %479 = vmatmul.mubr.bf16.gmra.mrb[0].mxu0 %v345
  %v480 = vpop.f32.mrb[0].mxu0
  %v481 = vadd.f32 %v341, %v480
  %v482 = vpop.f32.mrb[0].mxu0
  %v483 = vadd.f32 %v341, %v482
  %v484 = vpop.f32.mrb[0].mxu0
  %v485 = vpop.f32.mrb[0].mxu0
  %486 = vdwg.mxu0
  %v487 = vmax.f32 %v399, 0.0
  %v488 = vmax.f32 %v401, 0.0
  %v489 = vmax.f32 %v440, 0.0
  %v490 = vmax.f32 %v442, 0.0
  %v491 = vmax.f32 %v481, 0.0
  %v492 = vmax.f32 %v483, 0.0
  %v493 = vld [vmem:[%s5] sm:$0x3f]
  %v495 = vlaneseq
  %v496 = vshrl.u32 %v495, 7
  %v497 = vsub.s32 0, %v496
  %v498 = vrot.slane %v493, %v497
  %v499 = vlaneseq
  %v500 = vshrl.u32 %v499, 7
  %v501 = vsub.s32 1, %v500
  %v502 = vrot.slane %v493, %v501
  %v503 = vlaneseq
  %v504 = vshrl.u32 %v503, 7
  %v505 = vsub.s32 2, %v504
  %v506 = vrot.slane %v493, %v505
  %v507 = vlaneseq
  %v508 = vshrl.u32 %v507, 7
  %v509 = vsub.s32 3, %v508
  %v510 = vrot.slane %v493, %v509
  %v511 = vlaneseq
  %v512 = vshrl.u32 %v511, 7
  %v513 = vsub.s32 4, %v512
  %v514 = vrot.slane %v493, %v513
  %v515 = vlaneseq
  %v516 = vshrl.u32 %v515, 7
  %v517 = vsub.s32 5, %v516
  %v518 = vrot.slane %v493, %v517
  %v525 = vmul.f32 %v487, %v498
  %v526 = vmul.f32 %v488, %v502
  %v527 = vmul.f32 %v489, %v506
  %v528 = vmul.f32 %v490, %v510
  %v529 = vmul.f32 %v491, %v514
  %v530 = vmul.f32 %v492, %v518
  %v531 = vpack.c.bf16 %v525, %v525
  %v532 = vpack.c.bf16 %v526, %v526
  %v533 = vpack.c.bf16 %v527, %v527
  %v534 = vpack.c.bf16 %v528, %v528
  %v535 = vpack.c.bf16 %v529, %v529
  %v536 = vpack.c.bf16 %v530, %v530
  %543 = vrot.lane.b32.xlu0 %v531, 19
  %v544 = vpop.permute.xlu0 %543
  %545 = vrot.lane.b32.xlu0 %v532, 19
  %v546 = vpop.permute.xlu0 %545
  %547 = vrot.lane.b32.xlu0 %v533, 19
  %v548 = vpop.permute.xlu0 %547
  %549 = vrot.lane.b32.xlu0 %v534, 19
  %v550 = vpop.permute.xlu0 %549
  %551 = vrot.lane.b32.xlu0 %v535, 19
  %v552 = vpop.permute.xlu0 %551
  %553 = vrot.lane.b32.xlu0 %v536, 19
  %v554 = vpop.permute.xlu0 %553
  %v555 = vsel %vm57, %v544, %v546
  %v556 = vsel %vm57, %v546, %v548
  %v557 = vsel %vm57, %v548, %v550
  %v558 = vsel %vm57, %v550, %v552
  %v559 = vsel %vm57, %v552, %v554
  %v561 = vsel %vm63, 0, %v544
  %562 = vrot.lane.b32.xlu0 %v531, 18
  %v563 = vpop.permute.xlu0 %562
  %564 = vrot.lane.b32.xlu0 %v532, 18
  %v565 = vpop.permute.xlu0 %564
  %566 = vrot.lane.b32.xlu0 %v533, 18
  %v567 = vpop.permute.xlu0 %566
  %568 = vrot.lane.b32.xlu0 %v534, 18
  %v569 = vpop.permute.xlu0 %568
  %570 = vrot.lane.b32.xlu0 %v535, 18
  %v571 = vpop.permute.xlu0 %570
  %572 = vrot.lane.b32.xlu0 %v536, 18
  %v573 = vpop.permute.xlu0 %572
  %v574 = vsel %vm79, %v563, %v565
  %v575 = vsel %vm79, %v565, %v567
  %v576 = vsel %vm79, %v567, %v569
  %v577 = vsel %vm79, %v569, %v571
  %v578 = vsel %vm79, %v571, %v573
  %v580 = vsel %vm85, 0, %v563
  %581 = vrot.lane.b32.xlu0 %v531, 17
  %v582 = vpop.permute.xlu0 %581
  %583 = vrot.lane.b32.xlu0 %v532, 17
  %v584 = vpop.permute.xlu0 %583
  %585 = vrot.lane.b32.xlu0 %v533, 17
  %v586 = vpop.permute.xlu0 %585
  %587 = vrot.lane.b32.xlu0 %v534, 17
  %v588 = vpop.permute.xlu0 %587
  %589 = vrot.lane.b32.xlu0 %v535, 17
  %v590 = vpop.permute.xlu0 %589
  %591 = vrot.lane.b32.xlu0 %v536, 17
  %v592 = vpop.permute.xlu0 %591
  %v593 = vsel %vm100, %v582, %v584
  %v594 = vsel %vm100, %v584, %v586
  %v595 = vsel %vm100, %v586, %v588
  %v596 = vsel %vm100, %v588, %v590
  %v597 = vsel %vm100, %v590, %v592
  %v599 = vsel %vm106, 0, %v582
  %600 = vrot.lane.b32.xlu0 %v531, 1
  %v601 = vpop.permute.xlu0 %600
  %602 = vrot.lane.b32.xlu0 %v532, 1
  %v603 = vpop.permute.xlu0 %602
  %604 = vrot.lane.b32.xlu0 %v533, 1
  %v605 = vpop.permute.xlu0 %604
  %606 = vrot.lane.b32.xlu0 %v534, 1
  %v607 = vpop.permute.xlu0 %606
  %608 = vrot.lane.b32.xlu0 %v535, 1
  %v609 = vpop.permute.xlu0 %608
  %610 = vrot.lane.b32.xlu0 %v536, 1
  %v611 = vpop.permute.xlu0 %610
  %v612 = vsel %vm121, %v601, %v603
  %v613 = vsel %vm121, %v603, %v605
  %v614 = vsel %vm121, %v605, %v607
  %v615 = vsel %vm121, %v607, %v609
  %v616 = vsel %vm121, %v609, %v611
  %v618 = vsel %vm127, 0, %v601
  %619 = vrot.lane.b32.xlu0 %v531, 127
  %v620 = vpop.permute.xlu0 %619
  %621 = vrot.lane.b32.xlu0 %v532, 127
  %v622 = vpop.permute.xlu0 %621
  %623 = vrot.lane.b32.xlu0 %v533, 127
  %v624 = vpop.permute.xlu0 %623
  %625 = vrot.lane.b32.xlu0 %v534, 127
  %v626 = vpop.permute.xlu0 %625
  %627 = vrot.lane.b32.xlu0 %v535, 127
  %v628 = vpop.permute.xlu0 %627
  %629 = vrot.lane.b32.xlu0 %v536, 127
  %v630 = vpop.permute.xlu0 %629
  %v631 = vsel %vm142, %v620, %v622
  %v632 = vsel %vm142, %v622, %v624
  %v633 = vsel %vm142, %v624, %v626
  %v634 = vsel %vm142, %v626, %v628
  %v635 = vsel %vm142, %v628, %v630
  %v637 = vsel %vm148, %v630, 0
  %638 = vrot.lane.b32.xlu0 %v531, 111
  %v639 = vpop.permute.xlu0 %638
  %640 = vrot.lane.b32.xlu0 %v532, 111
  %v641 = vpop.permute.xlu0 %640
  %642 = vrot.lane.b32.xlu0 %v533, 111
  %v643 = vpop.permute.xlu0 %642
  %644 = vrot.lane.b32.xlu0 %v534, 111
  %v645 = vpop.permute.xlu0 %644
  %646 = vrot.lane.b32.xlu0 %v535, 111
  %v647 = vpop.permute.xlu0 %646
  %648 = vrot.lane.b32.xlu0 %v536, 111
  %v649 = vpop.permute.xlu0 %648
  %v650 = vsel %vm163, %v639, %v641
  %v651 = vsel %vm163, %v641, %v643
  %v652 = vsel %vm163, %v643, %v645
  %v653 = vsel %vm163, %v645, %v647
  %v654 = vsel %vm163, %v647, %v649
  %v656 = vsel %vm169, %v649, 0
  %657 = vrot.lane.b32.xlu0 %v531, 110
  %v658 = vpop.permute.xlu0 %657
  %659 = vrot.lane.b32.xlu0 %v532, 110
  %v660 = vpop.permute.xlu0 %659
  %661 = vrot.lane.b32.xlu0 %v533, 110
  %v662 = vpop.permute.xlu0 %661
  %663 = vrot.lane.b32.xlu0 %v534, 110
  %v664 = vpop.permute.xlu0 %663
  %665 = vrot.lane.b32.xlu0 %v535, 110
  %v666 = vpop.permute.xlu0 %665
  %667 = vrot.lane.b32.xlu0 %v536, 110
  %v668 = vpop.permute.xlu0 %667
  %v669 = vsel %vm184, %v658, %v660
  %v670 = vsel %vm184, %v660, %v662
  %v671 = vsel %vm184, %v662, %v664
  %v672 = vsel %vm184, %v664, %v666
  %v673 = vsel %vm184, %v666, %v668
  %v675 = vsel %vm190, %v668, 0
  %676 = vrot.lane.b32.xlu0 %v531, 109
  %v677 = vpop.permute.xlu0 %676
  %678 = vrot.lane.b32.xlu0 %v532, 109
  %v679 = vpop.permute.xlu0 %678
  %680 = vrot.lane.b32.xlu0 %v533, 109
  %v681 = vpop.permute.xlu0 %680
  %682 = vrot.lane.b32.xlu0 %v534, 109
  %v683 = vpop.permute.xlu0 %682
  %684 = vrot.lane.b32.xlu0 %v535, 109
  %v685 = vpop.permute.xlu0 %684
  %686 = vrot.lane.b32.xlu0 %v536, 109
  %v687 = vpop.permute.xlu0 %686
  %v688 = vsel %vm205, %v677, %v679
  %v689 = vsel %vm205, %v679, %v681
  %v690 = vsel %vm205, %v681, %v683
  %v691 = vsel %vm205, %v683, %v685
  %v692 = vsel %vm205, %v685, %v687
  %v694 = vsel %vm211, %v687, 0
  %v696 = vrot.slane %v580, 4
  %v697 = vrot.slane %v574, 4
  %v698 = vrot.slane %v575, 4
  %v699 = vrot.slane %v576, 4
  %v700 = vrot.slane %v577, 4
  %v701 = vrot.slane %v578, 4
  %v703 = vrot.slane %v618, 4
  %v704 = vrot.slane %v612, 4
  %v705 = vrot.slane %v613, 4
  %v706 = vrot.slane %v614, 4
  %v707 = vrot.slane %v615, 4
  %v708 = vrot.slane %v616, 4
  %v710 = vrot.slane %v631, 4
  %v711 = vrot.slane %v632, 4
  %v712 = vrot.slane %v633, 4
  %v713 = vrot.slane %v634, 4
  %v714 = vrot.slane %v635, 4
  %v715 = vrot.slane %v637, 4
  %v717 = vrot.slane %v669, 4
  %v718 = vrot.slane %v670, 4
  %v719 = vrot.slane %v671, 4
  %v720 = vrot.slane %v672, 4
  %v721 = vrot.slane %v673, 4
  %v722 = vrot.slane %v675, 4
  %v724 = vsel %vm242, %v561, %v696
  %v728 = vsel %vm242, %v555, %v697
  %v732 = vsel %vm242, %v556, %v698
  %v736 = vsel %vm242, %v557, %v699
  %v740 = vsel %vm242, %v558, %v700
  %v744 = vsel %vm242, %v559, %v701
  %v747 = vsel %vm242, %v599, %v703
  %v751 = vsel %vm242, %v593, %v704
  %v755 = vsel %vm242, %v594, %v705
  %v759 = vsel %vm242, %v595, %v706
  %v763 = vsel %vm242, %v596, %v707
  %v767 = vsel %vm242, %v597, %v708
  %v771 = vsel %vm242, %v531, %v710
  %v775 = vsel %vm242, %v532, %v711
  %v779 = vsel %vm242, %v533, %v712
  %v783 = vsel %vm242, %v534, %v713
  %v787 = vsel %vm242, %v535, %v714
  %v791 = vsel %vm242, %v536, %v715
  %v795 = vsel %vm242, %v650, %v717
  %v799 = vsel %vm242, %v651, %v718
  %v803 = vsel %vm242, %v652, %v719
  %v807 = vsel %vm242, %v653, %v720
  %v811 = vsel %vm242, %v654, %v721
  %v814 = vsel %vm242, %v656, %v722
  %v816 = vld [vmem:[%s3] sm:$0xf]
  %v817 = vld [vmem:[%s3 + $0x4] sm:$0xf]
  %v818 = vld [vmem:[%s4] sm:$0xff]
  %v819 = vld [vmem:[%s4 + $0x8] sm:$0xff]
  %821 = vset.pattern.permute.xlu0 0
  %822 = vperm.xlu0 %821, %v818
  %v823 = vpop.permute.xlu0 %822
  %826 = vset.pattern.permute.xlu0 0
  %827 = vperm.xlu0 %826, %v819
  %v828 = vpop.permute.xlu0 %827
  %v832 = vunpack.c.l.b16 %v816
  %v833 = vunpack.c.l.b16 %v817
  %v834 = vpack.c.b16 %v833, %v832
  %v836 = vsel %vm343, %v834, 0
  %v839 = vsel %vm242, %v688, 0
  %v842 = vsel %vm242, %v689, 0
  %v845 = vsel %vm242, %v690, 0
  %v848 = vsel %vm242, %v691, 0
  %v851 = vsel %vm242, %v692, 0
  %v853 = vsel %vm242, %v694, 0
  %855 = vmatprep.subr.bf16.mxu0 %v728
  %856 = vmatpush1.bf16.msra.mxu0 %v724
  %857 = vmatprep.subr.bf16.mxu0 %v751
  %858 = vmatpush1.bf16.msra.mxu0 %v747
  %859 = vmatprep.subr.bf16.mxu0 %v775
  %860 = vmatpush1.bf16.msra.mxu0 %v771
  %861 = vmatprep.subr.bf16.mxu0 %v799
  %862 = vmatpush1.bf16.msra.mxu0 %v795
  %863 = vmatprep.subr.bf16.mxu0 %v842
  %864 = vmatpush1.bf16.msra.mxu0 %v839
  %865 = vmatprep.subr.bf16.mxu0 0
  %866 = vmatpush1.bf16.msra.mxu0 0
  %867 = vmatprep.subr.bf16.mxu0 0
  %868 = vmatpush1.bf16.msra.mxu0 0
  %869 = vmatprep.subr.bf16.mxu0 0
  %870 = vmatpush1.bf16.msra.mxu0 0
  %871 = vmatprep.subr.bf16.mxu0 0
  %872 = vmatpush1.bf16.msra.mxu0 0
  %873 = vmatprep.subr.bf16.mxu0 0
  %874 = vmatpush1.bf16.msra.mxu0 0
  %875 = vmatprep.subr.bf16.mxu0 0
  %876 = vmatpush1.bf16.msra.mxu0 0
  %877 = vmatprep.subr.bf16.mxu0 0
  %878 = vmatpush1.bf16.msra.mxu0 0
  %879 = vmatprep.subr.bf16.mxu0 0
  %880 = vmatpush1.bf16.msra.mxu0 0
  %881 = vmatprep.subr.bf16.mxu0 0
  %882 = vmatpush1.bf16.msra.mxu0 0
  %883 = vmatprep.subr.bf16.mxu0 0
  %884 = vmatpush1.bf16.msra.mxu0 0
  %885 = vmatprep.subr.bf16.mxu0 0
  %886 = vmatpush1.bf16.msra.mxu0 0
  %887 = vmatprep.mubr.bf16.mxu0 0
  %888 = vmatmul.mubr.bf16.gmra.mrb[0].mxu0 %v836
  %v889 = vpop.f32.mrb[0].mxu0
  %v890 = vadd.f32 %v823, %v889
  %v891 = vpop.f32.mrb[0].mxu0
  %v892 = vadd.f32 %v823, %v891
  %v893 = vpop.f32.mrb[0].mxu0
  %v894 = vadd.f32 %v828, %v893
  %v895 = vpop.f32.mrb[0].mxu0
  %v896 = vadd.f32 %v828, %v895
  %897 = vdwg.mxu0
  %898 = vmatprep.subr.bf16.mxu0 %v736
  %899 = vmatpush1.bf16.msra.mxu0 %v732
  %900 = vmatprep.subr.bf16.mxu0 %v759
  %901 = vmatpush1.bf16.msra.mxu0 %v755
  %902 = vmatprep.subr.bf16.mxu0 %v783
  %903 = vmatpush1.bf16.msra.mxu0 %v779
  %904 = vmatprep.subr.bf16.mxu0 %v807
  %905 = vmatpush1.bf16.msra.mxu0 %v803
  %906 = vmatprep.subr.bf16.mxu0 %v848
  %907 = vmatpush1.bf16.msra.mxu0 %v845
  %908 = vmatprep.subr.bf16.mxu0 0
  %909 = vmatpush1.bf16.msra.mxu0 0
  %910 = vmatprep.subr.bf16.mxu0 0
  %911 = vmatpush1.bf16.msra.mxu0 0
  %912 = vmatprep.subr.bf16.mxu0 0
  %913 = vmatpush1.bf16.msra.mxu0 0
  %914 = vmatprep.subr.bf16.mxu0 0
  %915 = vmatpush1.bf16.msra.mxu0 0
  %916 = vmatprep.subr.bf16.mxu0 0
  %917 = vmatpush1.bf16.msra.mxu0 0
  %918 = vmatprep.subr.bf16.mxu0 0
  %919 = vmatpush1.bf16.msra.mxu0 0
  %920 = vmatprep.subr.bf16.mxu0 0
  %921 = vmatpush1.bf16.msra.mxu0 0
  %922 = vmatprep.subr.bf16.mxu0 0
  %923 = vmatpush1.bf16.msra.mxu0 0
  %924 = vmatprep.subr.bf16.mxu0 0
  %925 = vmatpush1.bf16.msra.mxu0 0
  %926 = vmatprep.subr.bf16.mxu0 0
  %927 = vmatpush1.bf16.msra.mxu0 0
  %928 = vmatprep.subr.bf16.mxu0 0
  %929 = vmatpush1.bf16.msra.mxu0 0
  %930 = vmatprep.mubr.bf16.mxu0 0
  %931 = vmatmul.mubr.bf16.gmra.mrb[0].mxu0 %v836
  %v932 = vpop.f32.mrb[0].mxu0
  %v933 = vadd.f32 %v823, %v932
  %v934 = vpop.f32.mrb[0].mxu0
  %v935 = vadd.f32 %v823, %v934
  %v936 = vpop.f32.mrb[0].mxu0
  %v937 = vadd.f32 %v828, %v936
  %v938 = vpop.f32.mrb[0].mxu0
  %v939 = vadd.f32 %v828, %v938
  %940 = vdwg.mxu0
  %941 = vmatprep.subr.bf16.mxu0 %v744
  %942 = vmatpush1.bf16.msra.mxu0 %v740
  %943 = vmatprep.subr.bf16.mxu0 %v767
  %944 = vmatpush1.bf16.msra.mxu0 %v763
  %945 = vmatprep.subr.bf16.mxu0 %v791
  %946 = vmatpush1.bf16.msra.mxu0 %v787
  %947 = vmatprep.subr.bf16.mxu0 %v814
  %948 = vmatpush1.bf16.msra.mxu0 %v811
  %949 = vmatprep.subr.bf16.mxu0 %v853
  %950 = vmatpush1.bf16.msra.mxu0 %v851
  %951 = vmatprep.subr.bf16.mxu0 0
  %952 = vmatpush1.bf16.msra.mxu0 0
  %953 = vmatprep.subr.bf16.mxu0 0
  %954 = vmatpush1.bf16.msra.mxu0 0
  %955 = vmatprep.subr.bf16.mxu0 0
  %956 = vmatpush1.bf16.msra.mxu0 0
  %957 = vmatprep.subr.bf16.mxu0 0
  %958 = vmatpush1.bf16.msra.mxu0 0
  %959 = vmatprep.subr.bf16.mxu0 0
  %960 = vmatpush1.bf16.msra.mxu0 0
  %961 = vmatprep.subr.bf16.mxu0 0
  %962 = vmatpush1.bf16.msra.mxu0 0
  %963 = vmatprep.subr.bf16.mxu0 0
  %964 = vmatpush1.bf16.msra.mxu0 0
  %965 = vmatprep.subr.bf16.mxu0 0
  %966 = vmatpush1.bf16.msra.mxu0 0
  %967 = vmatprep.subr.bf16.mxu0 0
  %968 = vmatpush1.bf16.msra.mxu0 0
  %969 = vmatprep.subr.bf16.mxu0 0
  %970 = vmatpush1.bf16.msra.mxu0 0
  %971 = vmatprep.subr.bf16.mxu0 0
  %972 = vmatpush1.bf16.msra.mxu0 0
  %973 = vmatprep.mubr.bf16.mxu0 0
  %974 = vmatmul.mubr.bf16.gmra.mrb[0].mxu0 %v836
  %v975 = vpop.f32.mrb[0].mxu0
  %v976 = vadd.f32 %v823, %v975
  %v977 = vpop.f32.mrb[0].mxu0
  %v978 = vadd.f32 %v823, %v977
  %v979 = vpop.f32.mrb[0].mxu0
  %v980 = vadd.f32 %v828, %v979
  %v981 = vpop.f32.mrb[0].mxu0
  %v982 = vadd.f32 %v828, %v981
  %983 = vdwg.mxu0
  %v984 = vmax.f32 %v890, 0.0
  %v985 = vmax.f32 %v892, 0.0
  %v986 = vmax.f32 %v933, 0.0
  %v987 = vmax.f32 %v935, 0.0
  %v988 = vmax.f32 %v976, 0.0
  %v989 = vmax.f32 %v978, 0.0
  %v990 = vmax.f32 %v894, 0.0
  %v991 = vmax.f32 %v896, 0.0
  %v992 = vmax.f32 %v937, 0.0
  %v993 = vmax.f32 %v939, 0.0
  %v994 = vmax.f32 %v980, 0.0
  %v995 = vmax.f32 %v982, 0.0
  %1008 = vrot.lane.b32.xlu0 %v984, 127
  %v1009 = vpop.permute.xlu0 %1008
  %1010 = vrot.lane.b32.xlu0 %v985, 127
  %v1011 = vpop.permute.xlu0 %1010
  %1012 = vrot.lane.b32.xlu0 %v986, 127
  %v1013 = vpop.permute.xlu0 %1012
  %1014 = vrot.lane.b32.xlu0 %v987, 127
  %v1015 = vpop.permute.xlu0 %1014
  %1016 = vrot.lane.b32.xlu0 %v988, 127
  %v1017 = vpop.permute.xlu0 %1016
  %1018 = vrot.lane.b32.xlu0 %v989, 127
  %v1019 = vpop.permute.xlu0 %1018
  %1020 = vrot.lane.b32.xlu0 %v990, 127
  %v1021 = vpop.permute.xlu0 %1020
  %1022 = vrot.lane.b32.xlu0 %v991, 127
  %v1023 = vpop.permute.xlu0 %1022
  %1024 = vrot.lane.b32.xlu0 %v992, 127
  %v1025 = vpop.permute.xlu0 %1024
  %1026 = vrot.lane.b32.xlu0 %v993, 127
  %v1027 = vpop.permute.xlu0 %1026
  %1028 = vrot.lane.b32.xlu0 %v994, 127
  %v1029 = vpop.permute.xlu0 %1028
  %1030 = vrot.lane.b32.xlu0 %v995, 127
  %v1031 = vpop.permute.xlu0 %1030
  %v1032 = vsel %vm148, %v1009, %v1011
  %v1033 = vsel %vm148, %v1011, %v1013
  %v1034 = vsel %vm148, %v1013, %v1015
  %v1035 = vsel %vm148, %v1015, %v1017
  %v1036 = vsel %vm148, %v1017, %v1019
  %v1037 = vsel %vm148, %v1021, %v1023
  %v1038 = vsel %vm148, %v1023, %v1025
  %v1039 = vsel %vm148, %v1025, %v1027
  %v1040 = vsel %vm148, %v1027, %v1029
  %v1041 = vsel %vm148, %v1029, %v1031
  %v1054 = vsel %vm148, %v1019, 0.0
  %v1055 = vsel %vm148, %v1031, 0.0
  %v1056 = vmax.f32 %v984, %v1032
  %v1057 = vmax.f32 %v985, %v1033
  %v1058 = vmax.f32 %v986, %v1034
  %v1059 = vmax.f32 %v987, %v1035
  %v1060 = vmax.f32 %v988, %v1036
  %v1061 = vmax.f32 %v989, %v1054
  %v1062 = vmax.f32 %v990, %v1037
  %v1063 = vmax.f32 %v991, %v1038
  %v1064 = vmax.f32 %v992, %v1039
  %v1065 = vmax.f32 %v993, %v1040
  %v1066 = vmax.f32 %v994, %v1041
  %v1067 = vmax.f32 %v995, %v1055
  %1068 = vrot.lane.b32.xlu0 %v984, 110
  %v1069 = vpop.permute.xlu0 %1068
  %1070 = vrot.lane.b32.xlu0 %v985, 110
  %v1071 = vpop.permute.xlu0 %1070
  %1072 = vrot.lane.b32.xlu0 %v986, 110
  %v1073 = vpop.permute.xlu0 %1072
  %1074 = vrot.lane.b32.xlu0 %v987, 110
  %v1075 = vpop.permute.xlu0 %1074
  %1076 = vrot.lane.b32.xlu0 %v988, 110
  %v1077 = vpop.permute.xlu0 %1076
  %1078 = vrot.lane.b32.xlu0 %v989, 110
  %v1079 = vpop.permute.xlu0 %1078
  %1080 = vrot.lane.b32.xlu0 %v990, 110
  %v1081 = vpop.permute.xlu0 %1080
  %1082 = vrot.lane.b32.xlu0 %v991, 110
  %v1083 = vpop.permute.xlu0 %1082
  %1084 = vrot.lane.b32.xlu0 %v992, 110
  %v1085 = vpop.permute.xlu0 %1084
  %1086 = vrot.lane.b32.xlu0 %v993, 110
  %v1087 = vpop.permute.xlu0 %1086
  %1088 = vrot.lane.b32.xlu0 %v994, 110
  %v1089 = vpop.permute.xlu0 %1088
  %1090 = vrot.lane.b32.xlu0 %v995, 110
  %v1091 = vpop.permute.xlu0 %1090
  %v1092 = vsel %vm190, %v1069, %v1071
  %v1093 = vsel %vm190, %v1071, %v1073
  %v1094 = vsel %vm190, %v1073, %v1075
  %v1095 = vsel %vm190, %v1075, %v1077
  %v1096 = vsel %vm190, %v1077, %v1079
  %v1097 = vsel %vm190, %v1081, %v1083
  %v1098 = vsel %vm190, %v1083, %v1085
  %v1099 = vsel %vm190, %v1085, %v1087
  %v1100 = vsel %vm190, %v1087, %v1089
  %v1101 = vsel %vm190, %v1089, %v1091
  %v1114 = vsel %vm190, %v1079, 0.0
  %v1115 = vsel %vm190, %v1091, 0.0
  %1116 = vrot.lane.b32.xlu0 %v984, 109
  %v1117 = vpop.permute.xlu0 %1116
  %1118 = vrot.lane.b32.xlu0 %v985, 109
  %v1119 = vpop.permute.xlu0 %1118
  %1120 = vrot.lane.b32.xlu0 %v986, 109
  %v1121 = vpop.permute.xlu0 %1120
  %1122 = vrot.lane.b32.xlu0 %v987, 109
  %v1123 = vpop.permute.xlu0 %1122
  %1124 = vrot.lane.b32.xlu0 %v988, 109
  %v1125 = vpop.permute.xlu0 %1124
  %1126 = vrot.lane.b32.xlu0 %v989, 109
  %v1127 = vpop.permute.xlu0 %1126
  %1128 = vrot.lane.b32.xlu0 %v990, 109
  %v1129 = vpop.permute.xlu0 %1128
  %1130 = vrot.lane.b32.xlu0 %v991, 109
  %v1131 = vpop.permute.xlu0 %1130
  %1132 = vrot.lane.b32.xlu0 %v992, 109
  %v1133 = vpop.permute.xlu0 %1132
  %1134 = vrot.lane.b32.xlu0 %v993, 109
  %v1135 = vpop.permute.xlu0 %1134
  %1136 = vrot.lane.b32.xlu0 %v994, 109
  %v1137 = vpop.permute.xlu0 %1136
  %1138 = vrot.lane.b32.xlu0 %v995, 109
  %v1139 = vpop.permute.xlu0 %1138
  %v1140 = vsel %vm211, %v1117, %v1119
  %v1141 = vsel %vm211, %v1119, %v1121
  %v1142 = vsel %vm211, %v1121, %v1123
  %v1143 = vsel %vm211, %v1123, %v1125
  %v1144 = vsel %vm211, %v1125, %v1127
  %v1145 = vsel %vm211, %v1129, %v1131
  %v1146 = vsel %vm211, %v1131, %v1133
  %v1147 = vsel %vm211, %v1133, %v1135
  %v1148 = vsel %vm211, %v1135, %v1137
  %v1149 = vsel %vm211, %v1137, %v1139
  %v1162 = vsel %vm211, %v1127, 0.0
  %v1163 = vsel %vm211, %v1139, 0.0
  %v1164 = vmax.f32 %v1092, %v1140
  %v1165 = vmax.f32 %v1093, %v1141
  %v1166 = vmax.f32 %v1094, %v1142
  %v1167 = vmax.f32 %v1095, %v1143
  %v1168 = vmax.f32 %v1096, %v1144
  %v1169 = vmax.f32 %v1114, %v1162
  %v1170 = vmax.f32 %v1097, %v1145
  %v1171 = vmax.f32 %v1098, %v1146
  %v1172 = vmax.f32 %v1099, %v1147
  %v1173 = vmax.f32 %v1100, %v1148
  %v1174 = vmax.f32 %v1101, %v1149
  %v1175 = vmax.f32 %v1115, %v1163
  %v1176 = vmax.f32 %v1056, %v1164
  %v1177 = vmax.f32 %v1057, %v1165
  %v1178 = vmax.f32 %v1058, %v1166
  %v1179 = vmax.f32 %v1059, %v1167
  %v1180 = vmax.f32 %v1060, %v1168
  %v1181 = vmax.f32 %v1061, %v1169
  %v1182 = vmax.f32 %v1062, %v1170
  %v1183 = vmax.f32 %v1063, %v1171
  %v1184 = vmax.f32 %v1064, %v1172
  %v1185 = vmax.f32 %v1065, %v1173
  %v1186 = vmax.f32 %v1066, %v1174
  %v1187 = vmax.f32 %v1067, %v1175
  %v1188 = vpack.c.bf16 %v1182, %v1176
  %v1189 = vpack.c.bf16 %v1183, %v1177
  %v1190 = vpack.c.bf16 %v1184, %v1178
  %v1191 = vpack.c.bf16 %v1185, %v1179
  %v1192 = vpack.c.bf16 %v1186, %v1180
  %v1193 = vpack.c.bf16 %v1187, %v1181
  %v1194 = vld [vmem:[%s6] sm:$0xf]
  %v1195 = vld [vmem:[%s6 + $0x4] sm:$0xf]
  %v1196 = vld [vmem:[%s6 + $0x8] sm:$0xf]
  %v1197 = vld [vmem:[%s6 + $0xc] sm:$0xf]
  %v1198 = vld [vmem:[%s6 + $0x10] sm:$0xf]
  %v1199 = vld [vmem:[%s6 + $0x14] sm:$0xf]
  %v1200 = vld [vmem:[%s6 + $0x18] sm:$0xf]
  %v1201 = vld [vmem:[%s6 + $0x1c] sm:$0xf]
  %v1202 = vld [vmem:[%s6 + $0x20] sm:$0xf]
  %v1203 = vld [vmem:[%s6 + $0x24] sm:$0xf]
  %v1204 = vld [vmem:[%s6 + $0x28] sm:$0xf]
  %v1205 = vld [vmem:[%s6 + $0x2c] sm:$0xf]
  %v1206 = vld [vmem:[%s6 + $0x30] sm:$0xf]
  %v1207 = vld [vmem:[%s6 + $0x34] sm:$0xf]
  %v1208 = vld [vmem:[%s6 + $0x38] sm:$0xf]
  %v1209 = vld [vmem:[%s6 + $0x3c] sm:$0xf]
  %v1210 = vld [vmem:[%s6 + $0x40] sm:$0xf]
  %v1211 = vld [vmem:[%s6 + $0x44] sm:$0xf]
  %v1212 = vld [vmem:[%s6 + $0x48] sm:$0xf]
  %v1213 = vld [vmem:[%s6 + $0x4c] sm:$0xf]
  %v1214 = vld [vmem:[%s6 + $0x50] sm:$0xf]
  %v1215 = vld [vmem:[%s6 + $0x54] sm:$0xf]
  %v1216 = vld [vmem:[%s6 + $0x58] sm:$0xf]
  %v1217 = vld [vmem:[%s6 + $0x5c] sm:$0xf]
  %v1218 = vld [vmem:[%s6 + $0x60] sm:$0xf]
  %v1219 = vld [vmem:[%s6 + $0x64] sm:$0xf]
  %v1220 = vld [vmem:[%s6 + $0x68] sm:$0xf]
  %v1221 = vld [vmem:[%s6 + $0x6c] sm:$0xf]
  %v1222 = vld [vmem:[%s6 + $0x70] sm:$0xf]
  %v1223 = vld [vmem:[%s6 + $0x74] sm:$0xf]
  %v1224 = vld [vmem:[%s6 + $0x78] sm:$0xf]
  %v1225 = vld [vmem:[%s6 + $0x7c] sm:$0xf]
  %v1226 = vld [vmem:[%s6 + $0x80] sm:$0xf]
  %v1227 = vld [vmem:[%s6 + $0x84] sm:$0xf]
  %v1228 = vld [vmem:[%s6 + $0x88] sm:$0xf]
  %v1229 = vld [vmem:[%s6 + $0x8c] sm:$0xf]
  %v1230 = vld [vmem:[%s6 + $0x90] sm:$0xf]
  %v1231 = vld [vmem:[%s6 + $0x94] sm:$0xf]
  %v1232 = vld [vmem:[%s6 + $0x98] sm:$0xf]
  %v1233 = vld [vmem:[%s6 + $0x9c] sm:$0xf]
  %v1234 = vld [vmem:[%s6 + $0xa0] sm:$0xf]
  %v1235 = vld [vmem:[%s6 + $0xa4] sm:$0xf]
  %v1236 = vld [vmem:[%s6 + $0xa8] sm:$0xf]
  %v1237 = vld [vmem:[%s6 + $0xac] sm:$0xf]
  %v1238 = vld [vmem:[%s6 + $0xb0] sm:$0xf]
  %v1239 = vld [vmem:[%s6 + $0xb4] sm:$0xf]
  %v1240 = vld [vmem:[%s6 + $0xb8] sm:$0xf]
  %v1241 = vld [vmem:[%s6 + $0xbc] sm:$0xf]
  %v1242 = vld [vmem:[%s6 + $0xc0] sm:$0xf]
  %v1243 = vld [vmem:[%s6 + $0xc4] sm:$0xf]
  %v1244 = vld [vmem:[%s6 + $0xc8] sm:$0xf]
  %v1245 = vld [vmem:[%s6 + $0xcc] sm:$0xf]
  %v1246 = vld [vmem:[%s6 + $0xd0] sm:$0xf]
  %v1247 = vld [vmem:[%s6 + $0xd4] sm:$0xf]
  %v1248 = vld [vmem:[%s6 + $0xd8] sm:$0xf]
  %v1249 = vld [vmem:[%s6 + $0xdc] sm:$0xf]
  %v1250 = vld [vmem:[%s6 + $0xe0] sm:$0xf]
  %v1251 = vld [vmem:[%s6 + $0xe4] sm:$0xf]
  %v1252 = vld [vmem:[%s6 + $0xe8] sm:$0xf]
  %v1253 = vld [vmem:[%s6 + $0xec] sm:$0xf]
  %v1254 = vld [vmem:[%s6 + $0xf0] sm:$0xf]
  %v1255 = vld [vmem:[%s6 + $0xf4] sm:$0xf]
  %v1256 = vld [vmem:[%s6 + $0xf8] sm:$0xf]
  %v1257 = vld [vmem:[%s6 + $0xfc] sm:$0xf]
  %v1258 = vld [vmem:[%s6 + $0x100] sm:$0xf]
  %v1259 = vld [vmem:[%s6 + $0x104] sm:$0xf]
  %v1260 = vld [vmem:[%s6 + $0x108] sm:$0xf]
  %v1261 = vld [vmem:[%s6 + $0x10c] sm:$0xf]
  %v1262 = vld [vmem:[%s6 + $0x110] sm:$0xf]
  %v1263 = vld [vmem:[%s6 + $0x114] sm:$0xf]
  %v1264 = vld [vmem:[%s6 + $0x118] sm:$0xf]
  %v1265 = vld [vmem:[%s6 + $0x11c] sm:$0xf]
  %v1266 = vld [vmem:[%s6 + $0x120] sm:$0xf]
  %v1267 = vld [vmem:[%s6 + $0x124] sm:$0xf]
  %v1268 = vld [vmem:[%s6 + $0x128] sm:$0xf]
  %v1269 = vld [vmem:[%s6 + $0x12c] sm:$0xf]
  %v1270 = vld [vmem:[%s6 + $0x130] sm:$0xf]
  %v1271 = vld [vmem:[%s6 + $0x134] sm:$0xf]
  %v1272 = vld [vmem:[%s6 + $0x138] sm:$0xf]
  %v1273 = vld [vmem:[%s6 + $0x13c] sm:$0xf]
  %v1274 = vld [vmem:[%s6 + $0x140] sm:$0xf]
  %v1275 = vld [vmem:[%s6 + $0x144] sm:$0xf]
  %v1276 = vld [vmem:[%s6 + $0x148] sm:$0xf]
  %v1277 = vld [vmem:[%s6 + $0x14c] sm:$0xf]
  %v1278 = vld [vmem:[%s6 + $0x150] sm:$0xf]
  %v1279 = vld [vmem:[%s6 + $0x154] sm:$0xf]
  %v1280 = vld [vmem:[%s6 + $0x158] sm:$0xf]
  %v1281 = vld [vmem:[%s6 + $0x15c] sm:$0xf]
  %v1282 = vld [vmem:[%s6 + $0x160] sm:$0xf]
  %v1283 = vld [vmem:[%s6 + $0x164] sm:$0xf]
  %v1284 = vld [vmem:[%s6 + $0x168] sm:$0xf]
  %v1285 = vld [vmem:[%s6 + $0x16c] sm:$0xf]
  %v1286 = vld [vmem:[%s6 + $0x170] sm:$0xf]
  %v1287 = vld [vmem:[%s6 + $0x174] sm:$0xf]
  %v1288 = vld [vmem:[%s6 + $0x178] sm:$0xf]
  %v1289 = vld [vmem:[%s6 + $0x17c] sm:$0xf]
  %v1386 = vunpack.c.l.b16 %v1194
  %v1387 = vunpack.c.l.b16 %v1195
  %v1388 = vunpack.c.l.b16 %v1196
  %v1389 = vunpack.c.l.b16 %v1197
  %v1390 = vunpack.c.l.b16 %v1198
  %v1391 = vunpack.c.l.b16 %v1199
  %v1392 = vunpack.c.l.b16 %v1200
  %v1393 = vunpack.c.l.b16 %v1201
  %v1394 = vunpack.c.l.b16 %v1202
  %v1395 = vunpack.c.l.b16 %v1203
  %v1396 = vunpack.c.l.b16 %v1204
  %v1397 = vunpack.c.l.b16 %v1205
  %v1398 = vunpack.c.l.b16 %v1206
  %v1399 = vunpack.c.l.b16 %v1207
  %v1400 = vunpack.c.l.b16 %v1208
  %v1401 = vunpack.c.l.b16 %v1209
  %v1402 = vunpack.c.l.b16 %v1210
  %v1403 = vunpack.c.l.b16 %v1211
  %v1404 = vunpack.c.l.b16 %v1212
  %v1405 = vunpack.c.l.b16 %v1213
  %v1406 = vunpack.c.l.b16 %v1214
  %v1407 = vunpack.c.l.b16 %v1215
  %v1408 = vunpack.c.l.b16 %v1216
  %v1409 = vunpack.c.l.b16 %v1217
  %v1410 = vunpack.c.l.b16 %v1218
  %v1411 = vunpack.c.l.b16 %v1219
  %v1412 = vunpack.c.l.b16 %v1220
  %v1413 = vunpack.c.l.b16 %v1221
  %v1414 = vunpack.c.l.b16 %v1222
  %v1415 = vunpack.c.l.b16 %v1223
  %v1416 = vunpack.c.l.b16 %v1224
  %v1417 = vunpack.c.l.b16 %v1225
  %v1418 = vunpack.c.l.b16 %v1226
  %v1419 = vunpack.c.l.b16 %v1227
  %v1420 = vunpack.c.l.b16 %v1228
  %v1421 = vunpack.c.l.b16 %v1229
  %v1422 = vunpack.c.l.b16 %v1230
  %v1423 = vunpack.c.l.b16 %v1231
  %v1424 = vunpack.c.l.b16 %v1232
  %v1425 = vunpack.c.l.b16 %v1233
  %v1426 = vunpack.c.l.b16 %v1234
  %v1427 = vunpack.c.l.b16 %v1235
  %v1428 = vunpack.c.l.b16 %v1236
  %v1429 = vunpack.c.l.b16 %v1237
  %v1430 = vunpack.c.l.b16 %v1238
  %v1431 = vunpack.c.l.b16 %v1239
  %v1432 = vunpack.c.l.b16 %v1240
  %v1433 = vunpack.c.l.b16 %v1241
  %v1434 = vunpack.c.l.b16 %v1242
  %v1435 = vunpack.c.l.b16 %v1243
  %v1436 = vunpack.c.l.b16 %v1244
  %v1437 = vunpack.c.l.b16 %v1245
  %v1438 = vunpack.c.l.b16 %v1246
  %v1439 = vunpack.c.l.b16 %v1247
  %v1440 = vunpack.c.l.b16 %v1248
  %v1441 = vunpack.c.l.b16 %v1249
  %v1442 = vunpack.c.l.b16 %v1250
  %v1443 = vunpack.c.l.b16 %v1251
  %v1444 = vunpack.c.l.b16 %v1252
  %v1445 = vunpack.c.l.b16 %v1253
  %v1446 = vunpack.c.l.b16 %v1254
  %v1447 = vunpack.c.l.b16 %v1255
  %v1448 = vunpack.c.l.b16 %v1256
  %v1449 = vunpack.c.l.b16 %v1257
  %v1450 = vunpack.c.l.b16 %v1258
  %v1451 = vunpack.c.l.b16 %v1259
  %v1452 = vunpack.c.l.b16 %v1260
  %v1453 = vunpack.c.l.b16 %v1261
  %v1454 = vunpack.c.l.b16 %v1262
  %v1455 = vunpack.c.l.b16 %v1263
  %v1456 = vunpack.c.l.b16 %v1264
  %v1457 = vunpack.c.l.b16 %v1265
  %v1458 = vunpack.c.l.b16 %v1266
  %v1459 = vunpack.c.l.b16 %v1267
  %v1460 = vunpack.c.l.b16 %v1268
  %v1461 = vunpack.c.l.b16 %v1269
  %v1462 = vunpack.c.l.b16 %v1270
  %v1463 = vunpack.c.l.b16 %v1271
  %v1464 = vunpack.c.l.b16 %v1272
  %v1465 = vunpack.c.l.b16 %v1273
  %v1466 = vunpack.c.l.b16 %v1274
  %v1467 = vunpack.c.l.b16 %v1275
  %v1468 = vunpack.c.l.b16 %v1276
  %v1469 = vunpack.c.l.b16 %v1277
  %v1470 = vunpack.c.l.b16 %v1278
  %v1471 = vunpack.c.l.b16 %v1279
  %v1472 = vunpack.c.l.b16 %v1280
  %v1473 = vunpack.c.l.b16 %v1281
  %v1474 = vunpack.c.l.b16 %v1282
  %v1475 = vunpack.c.l.b16 %v1283
  %v1476 = vunpack.c.l.b16 %v1284
  %v1477 = vunpack.c.l.b16 %v1285
  %v1478 = vunpack.c.l.b16 %v1286
  %v1479 = vunpack.c.l.b16 %v1287
  %v1480 = vunpack.c.l.b16 %v1288
  %v1481 = vunpack.c.l.b16 %v1289
  %v1482 = vpack.c.b16 %v1387, %v1386
  %v1483 = vpack.c.b16 %v1389, %v1388
  %v1484 = vpack.c.b16 %v1391, %v1390
  %v1485 = vpack.c.b16 %v1393, %v1392
  %v1486 = vpack.c.b16 %v1395, %v1394
  %v1487 = vpack.c.b16 %v1397, %v1396
  %v1488 = vpack.c.b16 %v1399, %v1398
  %v1489 = vpack.c.b16 %v1401, %v1400
  %v1490 = vpack.c.b16 %v1403, %v1402
  %v1491 = vpack.c.b16 %v1405, %v1404
  %v1492 = vpack.c.b16 %v1407, %v1406
  %v1493 = vpack.c.b16 %v1409, %v1408
  %v1494 = vpack.c.b16 %v1411, %v1410
  %v1495 = vpack.c.b16 %v1413, %v1412
  %v1496 = vpack.c.b16 %v1415, %v1414
  %v1497 = vpack.c.b16 %v1417, %v1416
  %v1498 = vpack.c.b16 %v1419, %v1418
  %v1499 = vpack.c.b16 %v1421, %v1420
  %v1500 = vpack.c.b16 %v1423, %v1422
  %v1501 = vpack.c.b16 %v1425, %v1424
  %v1502 = vpack.c.b16 %v1427, %v1426
  %v1503 = vpack.c.b16 %v1429, %v1428
  %v1504 = vpack.c.b16 %v1431, %v1430
  %v1505 = vpack.c.b16 %v1433, %v1432
  %v1506 = vpack.c.b16 %v1435, %v1434
  %v1507 = vpack.c.b16 %v1437, %v1436
  %v1508 = vpack.c.b16 %v1439, %v1438
  %v1509 = vpack.c.b16 %v1441, %v1440
  %v1510 = vpack.c.b16 %v1443, %v1442
  %v1511 = vpack.c.b16 %v1445, %v1444
  %v1512 = vpack.c.b16 %v1447, %v1446
  %v1513 = vpack.c.b16 %v1449, %v1448
  %v1514 = vpack.c.b16 %v1451, %v1450
  %v1515 = vpack.c.b16 %v1453, %v1452
  %v1516 = vpack.c.b16 %v1455, %v1454
  %v1517 = vpack.c.b16 %v1457, %v1456
  %v1518 = vpack.c.b16 %v1459, %v1458
  %v1519 = vpack.c.b16 %v1461, %v1460
  %v1520 = vpack.c.b16 %v1463, %v1462
  %v1521 = vpack.c.b16 %v1465, %v1464
  %v1522 = vpack.c.b16 %v1467, %v1466
  %v1523 = vpack.c.b16 %v1469, %v1468
  %v1524 = vpack.c.b16 %v1471, %v1470
  %v1525 = vpack.c.b16 %v1473, %v1472
  %v1526 = vpack.c.b16 %v1475, %v1474
  %v1527 = vpack.c.b16 %v1477, %v1476
  %v1528 = vpack.c.b16 %v1479, %v1478
  %v1529 = vpack.c.b16 %v1481, %v1480
  %1578 = vmatprep.subr.bf16.mxu0 0
  %1579 = vmatpush1.bf16.msra.mxu0 %v1482
  %1580 = vmatprep.subr.bf16.mxu0 0
  %1581 = vmatpush1.bf16.msra.mxu0 %v1483
  %1582 = vmatprep.subr.bf16.mxu0 0
  %1583 = vmatpush1.bf16.msra.mxu0 %v1484
  %1584 = vmatprep.subr.bf16.mxu0 0
  %1585 = vmatpush1.bf16.msra.mxu0 %v1485
  %1586 = vmatprep.subr.bf16.mxu0 0
  %1587 = vmatpush1.bf16.msra.mxu0 %v1486
  %1588 = vmatprep.subr.bf16.mxu0 0
  %1589 = vmatpush1.bf16.msra.mxu0 %v1487
  %1590 = vmatprep.subr.bf16.mxu0 0
  %1591 = vmatpush1.bf16.msra.mxu0 %v1488
  %1592 = vmatprep.subr.bf16.mxu0 0
  %1593 = vmatpush1.bf16.msra.mxu0 %v1489
  %1594 = vmatprep.subr.bf16.mxu0 0
  %1595 = vmatpush1.bf16.msra.mxu0 %v1490
  %1596 = vmatprep.subr.bf16.mxu0 0
  %1597 = vmatpush1.bf16.msra.mxu0 %v1491
  %1598 = vmatprep.subr.bf16.mxu0 0
  %1599 = vmatpush1.bf16.msra.mxu0 %v1492
  %1600 = vmatprep.subr.bf16.mxu0 0
  %1601 = vmatpush1.bf16.msra.mxu0 %v1493
  %1602 = vmatprep.subr.bf16.mxu0 0
  %1603 = vmatpush1.bf16.msra.mxu0 %v1494
  %1604 = vmatprep.subr.bf16.mxu0 0
  %1605 = vmatpush1.bf16.msra.mxu0 %v1495
  %1606 = vmatprep.subr.bf16.mxu0 0
  %1607 = vmatpush1.bf16.msra.mxu0 %v1496
  %1608 = vmatprep.subr.bf16.mxu0 0
  %1609 = vmatpush1.bf16.msra.mxu0 %v1497
  %1610 = vmatprep.mubr.bf16.mxu0 %v1189
  %1611 = vmatmul.mubr.bf16.gmra.mrb[0].mxu0 %v1188
  %v1612 = vpop.f32.mrb[0].mxu0
  %v1613 = vadd.f32 0.0, %v1612
  %v1614 = vpop.f32.mrb[0].mxu0
  %v1615 = vpop.f32.mrb[0].mxu0
  %v1616 = vadd.f32 0.0, %v1615
  %v1617 = vpop.f32.mrb[0].mxu0
  %1618 = vdwg.mxu0
  %1619 = vmatprep.subr.bf16.mxu0 0
  %1620 = vmatpush1.bf16.msra.mxu0 %v1498
  %1621 = vmatprep.subr.bf16.mxu0 0
  %1622 = vmatpush1.bf16.msra.mxu0 %v1499
  %1623 = vmatprep.subr.bf16.mxu0 0
  %1624 = vmatpush1.bf16.msra.mxu0 %v1500
  %1625 = vmatprep.subr.bf16.mxu0 0
  %1626 = vmatpush1.bf16.msra.mxu0 %v1501
  %1627 = vmatprep.subr.bf16.mxu0 0
  %1628 = vmatpush1.bf16.msra.mxu0 %v1502
  %1629 = vmatprep.subr.bf16.mxu0 0
  %1630 = vmatpush1.bf16.msra.mxu0 %v1503
  %1631 = vmatprep.subr.bf16.mxu0 0
  %1632 = vmatpush1.bf16.msra.mxu0 %v1504
  %1633 = vmatprep.subr.bf16.mxu0 0
  %1634 = vmatpush1.bf16.msra.mxu0 %v1505
  %1635 = vmatprep.subr.bf16.mxu0 0
  %1636 = vmatpush1.bf16.msra.mxu0 %v1506
  %1637 = vmatprep.subr.bf16.mxu0 0
  %1638 = vmatpush1.bf16.msra.mxu0 %v1507
  %1639 = vmatprep.subr.bf16.mxu0 0
  %1640 = vmatpush1.bf16.msra.mxu0 %v1508
  %1641 = vmatprep.subr.bf16.mxu0 0
  %1642 = vmatpush1.bf16.msra.mxu0 %v1509
  %1643 = vmatprep.subr.bf16.mxu0 0
  %1644 = vmatpush1.bf16.msra.mxu0 %v1510
  %1645 = vmatprep.subr.bf16.mxu0 0
  %1646 = vmatpush1.bf16.msra.mxu0 %v1511
  %1647 = vmatprep.subr.bf16.mxu0 0
  %1648 = vmatpush1.bf16.msra.mxu0 %v1512
  %1649 = vmatprep.subr.bf16.mxu0 0
  %1650 = vmatpush1.bf16.msra.mxu0 %v1513
  %1651 = vmatprep.mubr.bf16.mxu0 %v1191
  %1652 = vmatmul.mubr.bf16.gmra.mrb[0].mxu0 %v1190
  %v1653 = vpop.f32.mrb[0].mxu0
  %v1654 = vadd.f32 %v1613, %v1653
  %v1655 = vpop.f32.mrb[0].mxu0
  %v1656 = vpop.f32.mrb[0].mxu0
  %v1657 = vadd.f32 %v1616, %v1656
  %v1658 = vpop.f32.mrb[0].mxu0
  %1659 = vdwg.mxu0
  %1660 = vmatprep.subr.bf16.mxu0 0
  %1661 = vmatpush1.bf16.msra.mxu0 %v1514
  %1662 = vmatprep.subr.bf16.mxu0 0
  %1663 = vmatpush1.bf16.msra.mxu0 %v1515
  %1664 = vmatprep.subr.bf16.mxu0 0
  %1665 = vmatpush1.bf16.msra.mxu0 %v1516
  %1666 = vmatprep.subr.bf16.mxu0 0
  %1667 = vmatpush1.bf16.msra.mxu0 %v1517
  %1668 = vmatprep.subr.bf16.mxu0 0
  %1669 = vmatpush1.bf16.msra.mxu0 %v1518
  %1670 = vmatprep.subr.bf16.mxu0 0
  %1671 = vmatpush1.bf16.msra.mxu0 %v1519
  %1672 = vmatprep.subr.bf16.mxu0 0
  %1673 = vmatpush1.bf16.msra.mxu0 %v1520
  %1674 = vmatprep.subr.bf16.mxu0 0
  %1675 = vmatpush1.bf16.msra.mxu0 %v1521
  %1676 = vmatprep.subr.bf16.mxu0 0
  %1677 = vmatpush1.bf16.msra.mxu0 %v1522
  %1678 = vmatprep.subr.bf16.mxu0 0
  %1679 = vmatpush1.bf16.msra.mxu0 %v1523
  %1680 = vmatprep.subr.bf16.mxu0 0
  %1681 = vmatpush1.bf16.msra.mxu0 %v1524
  %1682 = vmatprep.subr.bf16.mxu0 0
  %1683 = vmatpush1.bf16.msra.mxu0 %v1525
  %1684 = vmatprep.subr.bf16.mxu0 0
  %1685 = vmatpush1.bf16.msra.mxu0 %v1526
  %1686 = vmatprep.subr.bf16.mxu0 0
  %1687 = vmatpush1.bf16.msra.mxu0 %v1527
  %1688 = vmatprep.subr.bf16.mxu0 0
  %1689 = vmatpush1.bf16.msra.mxu0 %v1528
  %1690 = vmatprep.subr.bf16.mxu0 0
  %1691 = vmatpush1.bf16.msra.mxu0 %v1529
  %1692 = vmatprep.mubr.bf16.mxu0 %v1193
  %1693 = vmatmul.mubr.bf16.gmra.mrb[0].mxu0 %v1192
  %v1694 = vpop.f32.mrb[0].mxu0
  %v1695 = vadd.f32 %v1654, %v1694
  %v1696 = vpop.f32.mrb[0].mxu0
  %v1697 = vpop.f32.mrb[0].mxu0
  %v1698 = vadd.f32 %v1657, %v1697
  %v1699 = vpop.f32.mrb[0].mxu0
  %1700 = vdwg.mxu0
  %1701 = vst [vmem:[%s7] sm:$0xff] %v1695
  %1702 = vst [vmem:[%s7 + $0x8] sm:$0xff] %v1698
  // Predicated region
  $region30: #{cnn_module_forward.1} parent=0 // pred_check
    _
  $region31: #{cnn_module_forward.1} parent=0 // pred_check_branch
    %1704 = sbr.rel (0) target = $region33
  $region32: #{cnn_module_forward.1} parent=0 // pred_region
    _
  $region33: #{cnn_module_forward.1} parent=0 // pred_fallthru
    _
  // Predicated region
  $region34: #{cnn_module_forward.1} parent=0 // pred_check
    _
  $region35: #{cnn_module_forward.1} parent=0 // pred_check_branch
    %1706 = sbr.rel (0) target = $region37
  $region36: #{cnn_module_forward.1} parent=0 // pred_region
    _
  $region37: #{cnn_module_forward.1} parent=0 // pred_fallthru
    _

</llo_original>
